<compile_context>
chip_gen: v7x
topology: tpu7x:2x2x1
jax: 0.10.0
libtpu: 0.0.40
codegen_flags: <defaults>
</compile_context>

<pallas_src>
import functools

import jax
import jax.numpy as jnp
import numpy as np
from jax import lax
from jax.experimental import pallas as pl
from jax.experimental.pallas import tpu as pltpu

EPS = 1e-5                       # nn.BatchNorm2d default eps
NEG_SLOPE = 0.1                  # nn.LeakyReLU(0.1)
VMEM_LIMIT = 48 * 1024 * 1024    # explicit scoped-VMEM cap (< v7x 64 MiB physical)


# ------------------------------------------------------------------ kernels --
def _conv_stats_kernel(xa_ref, xh_ref, w_ref, b_ref, mask_ref, y_ref, stats_ref,
                       *, tile_m, tap_offsets):
    """Pass 1: in-kernel im2col + ONE fused MXU dot + per-tile BN partial sums.

    xa_ref:    (TM, Cin)       bf16  main pixel tile of the shifted padded raster
    xh_ref:    (HB, Cin)       bf16  halo rows (start of the next tile)
    w_ref:     (K*K*Cin, Cout) bf16  conv weights, tap-major / channel-minor
    b_ref:     (1, Cout)       f32   conv bias (zeros when BN is used)
    mask_ref:  (TM, 1)         f32   1.0 for valid (non-padding-ring) pixels
    y_ref:     (TM, Cout)      f32   conv output (pre-BN)
    stats_ref: (8, 2*Cout)     f32   row 0 = [sum(y), sum(y^2)] over valid pixels
    """
    xw = jnp.concatenate([xa_ref[...], xh_ref[...]], axis=0)        # (TM+HB, Cin)
    # im2col: K*K statically shifted views concatenated on lanes, then a single
    # dot with contraction length K*K*Cin (bf16 in, f32 accumulate on the MXU).
    patches = jnp.concatenate([xw[k:k + tile_m, :] for k in tap_offsets],
                              axis=1)                               # (TM, K*K*Cin)
    y = jnp.dot(patches, w_ref[...], preferred_element_type=jnp.float32)
    y = y + b_ref[...]
    y_ref[...] = y

    # BatchNorm partial statistics (valid pixels only; padding ring masked out).
    cout = y.shape[1]
    m = mask_ref[...]                                               # (TM, 1)
    ym = y * m
    srow = jnp.concatenate([jnp.sum(ym, axis=0, keepdims=True),
                            jnp.sum(ym * y, axis=0, keepdims=True)], axis=1)
    stats_ref[...] = jnp.concatenate(
        [srow, jnp.zeros((7, 2 * cout), jnp.float32)], axis=0)


def _bn_lrelu_kernel(y_ref, stats_ref, g_ref, b_ref, o_ref, *, count, cout):
    """Pass 2: finalize batch stats, normalize, scale/shift, LeakyReLU(0.1)."""
    tot = jnp.sum(stats_ref[...], axis=0, keepdims=True)            # (1, 2*Cout)
    mean = tot[:, :cout] / count
    var = tot[:, cout:] / count - mean * mean     # biased var (training-mode BN)
    scale = g_ref[...] * lax.rsqrt(var + EPS)     # rsqrt -> EUP slot
    shift = b_ref[...] - mean * scale
    z = y_ref[...] * scale + shift
    o_ref[...] = jnp.where(z > 0, z, NEG_SLOPE * z)


# ---------------------------------------------------------------- tile sizing --
def _choose_tiles(ptot, cin, cout, kk, wp, pad, tile_m=None,
                  vmem_budget_bytes=8 * 1024 * 1024):
    """Pick pixel-tile TM (multiple of halo block HB) under a VMEM budget that
    comfortably fits every generation, including v7x's 64 MiB physical VMEM."""
    halo_span = 2 * pad * (wp + 1)                  # largest im2col tap offset
    hb = max(8, ((halo_span + 7) // 8) * 8)         # halo-block rows (mult of 8)
    if tile_m is None:
        # double-buffered bf16 x-tile + in-kernel im2col copy + f32 y/out tiles
        per_row = 2 * 2 * cin + 2 * kk * cin + 4 * 4 * cout
        tile_m = max(hb, min(4096, vmem_budget_bytes // max(per_row, 1)))
    tm = max(hb, (int(tile_m) // hb) * hb)
    tm = min(tm, ((ptot + hb - 1) // hb) * hb)      # don't exceed the problem
    nt = (ptot + tm - 1) // tm
    return tm, hb, nt


# ------------------------------------------------------------------- forward --
def convblock_forward(x_nchw, params, *, kernel_size, padding, use_bn_act=True,
                      tile_m=None):
    """Pallas-backed ConvBlock.forward (stride-1 'same' conv).  NCHW in/out."""
    n, cin, h, w = x_nchw.shape
    k, p = kernel_size, padding
    if k % 2 != 1 or p != k // 2:
        raise NotImplementedError("only stride-1 odd-kernel 'same' convs")
    cout = params["w"].shape[0]
    hp, wp = h + 2 * p, w + 2 * p
    ptot = n * hp * wp
    kk = k * k

    tm, hb, nt = _choose_tiles(ptot, cin, cout, kk, wp, p, tile_m)
    f_shift = p * (wp + 1)               # front zero rows -> all tap offsets >= 0
    total_rows = nt * tm + hb            # main tiles + one trailing halo block

    # --- wrapper layout glue: NCHW -> zero-padded NHWC raster (pixels, Cin) ---
    x_pad = jnp.pad(jnp.transpose(x_nchw, (0, 2, 3, 1)),
                    ((0, 0), (p, p), (p, p), (0, 0)))
    x_flat = x_pad.reshape(ptot, cin)
    xf = jnp.pad(x_flat, ((f_shift, total_rows - f_shift - ptot), (0, 0)))
    xf = xf.astype(jnp.bfloat16)                         # bf16 MXU operand

    # conv weight (Cout, Cin, K, K) -> (K*K*Cin, Cout), tap-major/channel-minor
    w_mat = jnp.transpose(params["w"], (2, 3, 1, 0)).reshape(kk * cin, cout)
    w_mat = w_mat.astype(jnp.bfloat16)

    bias = (jnp.zeros((1, cout), jnp.float32) if use_bn_act
            else params["bias"].reshape(1, cout).astype(jnp.float32))

    # 1.0 on real output pixels, 0.0 on the zero-padding ring / tail rows
    mask = jnp.pad(jnp.ones((n, h, w), jnp.float32),
                   ((0, 0), (p, p), (p, p))).reshape(ptot, 1)
    mask = jnp.pad(mask, ((0, nt * tm - ptot), (0, 0)))

    tap_offsets = tuple(dy * wp + dx for dy in range(k) for dx in range(k))
    conv_kernel = functools.partial(_conv_stats_kernel, tile_m=tm,
                                    tap_offsets=tap_offsets)

    flops1 = 2 * nt * tm * kk * cin * cout
    bytes1 = (xf.size * 2 + mask.size * 4 + w_mat.size * 2
              + nt * tm * cout * 4 + nt * 8 * 2 * cout * 4)

    y_flat, stats = pl.pallas_call(
        conv_kernel,
        out_shape=(jax.ShapeDtypeStruct((nt * tm, cout), jnp.float32),
                   jax.ShapeDtypeStruct((nt * 8, 2 * cout), jnp.float32)),
        grid=(nt,),
        in_specs=[
            pl.BlockSpec((tm, cin), lambda i: (i, 0)),                    # main tile
            pl.BlockSpec((hb, cin), lambda i: ((i + 1) * (tm // hb), 0)),  # halo
            pl.BlockSpec((kk * cin, cout), lambda i: (0, 0)),             # weights
            pl.BlockSpec((1, cout), lambda i: (0, 0)),                    # bias
            pl.BlockSpec((tm, 1), lambda i: (i, 0)),                      # mask
        ],
        out_specs=(pl.BlockSpec((tm, cout), lambda i: (i, 0)),
                   pl.BlockSpec((8, 2 * cout), lambda i: (i, 0))),
        compiler_params=pltpu.CompilerParams(
            dimension_semantics=("parallel",),
            vmem_limit_bytes=VMEM_LIMIT),
        cost_estimate=pl.CostEstimate(flops=int(flops1), transcendentals=0,
                                      bytes_accessed=int(bytes1)),
    )(xf, xf, w_mat, bias, mask)        # same HBM buffer passed for main + halo

    if use_bn_act:
        bn_kernel = functools.partial(_bn_lrelu_kernel,
                                      count=float(n * h * w), cout=cout)
        flops2 = 6 * nt * tm * cout
        bytes2 = 2 * nt * tm * cout * 4 + stats.size * 4 + 2 * cout * 4
        out_flat = pl.pallas_call(
            bn_kernel,
            out_shape=jax.ShapeDtypeStruct((nt * tm, cout), jnp.float32),
            grid=(nt,),
            in_specs=[
                pl.BlockSpec((tm, cout), lambda i: (i, 0)),
                pl.BlockSpec((nt * 8, 2 * cout), lambda i: (0, 0)),
                pl.BlockSpec((1, cout), lambda i: (0, 0)),
                pl.BlockSpec((1, cout), lambda i: (0, 0)),
            ],
            out_specs=pl.BlockSpec((tm, cout), lambda i: (i, 0)),
            compiler_params=pltpu.CompilerParams(
                dimension_semantics=("parallel",),
                vmem_limit_bytes=VMEM_LIMIT),
            cost_estimate=pl.CostEstimate(flops=int(flops2),
                                          transcendentals=int(cout),
                                          bytes_accessed=int(bytes2)),
        )(y_flat, stats,
          params["gamma"].reshape(1, cout).astype(jnp.float32),
          params["beta"].reshape(1, cout).astype(jnp.float32))
    else:
        out_flat = y_flat               # bn_act=False branch: conv(+bias) only

    # wrapper layout glue: drop padding ring / tail rows, back to NCHW
    out = out_flat[:ptot].reshape(n, hp, wp, cout)[:, p:p + h, p:p + w, :]
    return jnp.transpose(out, (0, 3, 1, 2))


# ---------------------------------------------------------------- parameters --
def init_convblock_params(key, c_in, c_out, kernel_size):
    k1, k2, k3, k4 = jax.random.split(key, 4)
    return dict(
        w=0.1 * jax.random.normal(k1, (c_out, c_in, kernel_size, kernel_size),
                                  jnp.float32),
        gamma=1.0 + 0.1 * jax.random.normal(k2, (c_out,), jnp.float32),
        beta=0.1 * jax.random.normal(k3, (c_out,), jnp.float32),
        bias=0.1 * jax.random.normal(k4, (c_out,), jnp.float32),
    )


# ----------------------------------------------------------------- reference --
def ref_convblock(x, params, *, padding, use_bn_act=True):
    y = lax.conv_general_dilated(
        x, params["w"], (1, 1), [(padding, padding)] * 2,
        dimension_numbers=("NCHW", "OIHW", "NCHW"),
        precision=lax.Precision.HIGHEST)
    if not use_bn_act:
        return y + params["bias"].reshape(1, -1, 1, 1)
    mean = y.mean(axis=(0, 2, 3), keepdims=True)
    var = ((y - mean) ** 2).mean(axis=(0, 2, 3), keepdims=True)
    z = ((y - mean) * lax.rsqrt(var + EPS)
         * params["gamma"].reshape(1, -1, 1, 1)
         + params["beta"].reshape(1, -1, 1, 1))
    return jnp.where(z > 0, z, NEG_SLOPE * z)


# ---------------------------------------------------------------------- main --
if __name__ == "__main__":
    key = jax.random.PRNGKey(0)
    kx, kp3, kp1 = jax.random.split(key, 3)

    N, C_IN, H, W = 2, 16, 16, 16
    x = jax.random.normal(kx, (N, C_IN, H, W), jnp.float32)

    def check(out, ref, name):
        out = np.asarray(jax.block_until_ready(out))
        ref = np.asarray(jax.block_until_ready(ref))
        if out.shape != ref.shape or not np.allclose(out, ref, rtol=3e-2,
                                                     atol=3e-2):
            raise AssertionError(f"Pallas ConvBlock mismatch: {name}")

    # ConvBlock(16, 32, kernel_size=3, padding=1), default bn_act=True
    p3 = init_convblock_params(kp3, C_IN, 32, 3)
    out = convblock_forward(x, p3, kernel_size=3, padding=1, use_bn_act=True,
                            tile_m=256)   # small tile -> exercises multi-tile BN
    check(out, ref_convblock(x, p3, padding=1, use_bn_act=True), "3x3 bn_act")

    # ConvBlock(16, 8, kernel_size=1) -- 1x1 conv path
    p1 = init_convblock_params(kp1, C_IN, 8, 1)
    out = convblock_forward(x, p1, kernel_size=1, padding=0, use_bn_act=True,
                            tile_m=256)
    check(out, ref_convblock(x, p1, padding=0, use_bn_act=True), "1x1 bn_act")

    # bn_act=False branch: conv (with bias) only
    out = convblock_forward(x, p3, kernel_size=3, padding=1, use_bn_act=False,
                            tile_m=256)
    check(out, ref_convblock(x, p3, padding=1, use_bn_act=False), "3x3 conv-only")

    print("KERNEL_OK")
</pallas_src>

<mosaic_0001>
module attributes {stable_mosaic.version = 11 : i64} {
  func.func @_conv_stats_kernel(%arg0: i32, %arg1: memref<240x16xbf16, #tpu.memory_space<vmem>>, %arg2: memref<40x16xbf16, #tpu.memory_space<vmem>>, %arg3: memref<144x32xbf16, #tpu.memory_space<vmem>>, %arg4: memref<1x32xf32, #tpu.memory_space<vmem>>, %arg5: memref<240x1xf32, #tpu.memory_space<vmem>>, %arg6: memref<240x32xf32, #tpu.memory_space<vmem>>, %arg7: memref<8x64xf32, #tpu.memory_space<vmem>>) attributes {dimension_semantics = [#tpu.dimension_semantics<parallel>], iteration_bounds = array<i64: 3>, scalar_prefetch = 0 : i64, scratch_operands = 0 : i64, tpu.core_type = #tpu.core_type<tc>, window_params = [{transform_indices = @transform_0, window_bounds = array<i64: 240, 16>}, {transform_indices = @transform_1, window_bounds = array<i64: 40, 16>}, {pipeline_mode = #tpu.pipeline_mode<synchronous>, transform_indices = @transform_2, window_bounds = array<i64: 144, 32>}, {pipeline_mode = #tpu.pipeline_mode<synchronous>, transform_indices = @transform_3, window_bounds = array<i64: 1, 32>}, {transform_indices = @transform_4, window_bounds = array<i64: 240, 1>}, {transform_indices = @transform_5, window_bounds = array<i64: 240, 32>}, {transform_indices = @transform_6, window_bounds = array<i64: 8, 64>}]} {
    %c0 = arith.constant 0 : index
    %c0_0 = arith.constant 0 : index
    %0 = vector.load %arg1[%c0, %c0_0] : memref<240x16xbf16, #tpu.memory_space<vmem>>, vector<240x16xbf16>
    %c0_1 = arith.constant 0 : index
    %c0_2 = arith.constant 0 : index
    %1 = vector.load %arg2[%c0_1, %c0_2] : memref<40x16xbf16, #tpu.memory_space<vmem>>, vector<40x16xbf16>
    %2 = tpu.concatenate %0, %1 in 0 : vector<240x16xbf16>, vector<40x16xbf16> -> vector<280x16xbf16>
    %3 = vector.extract_strided_slice %2 {offsets = [0, 0], sizes = [240, 16], strides = [1, 1]} : vector<280x16xbf16> to vector<240x16xbf16>
    %4 = vector.extract_strided_slice %2 {offsets = [1, 0], sizes = [240, 16], strides = [1, 1]} : vector<280x16xbf16> to vector<240x16xbf16>
    %5 = vector.extract_strided_slice %2 {offsets = [2, 0], sizes = [240, 16], strides = [1, 1]} : vector<280x16xbf16> to vector<240x16xbf16>
    %6 = vector.extract_strided_slice %2 {offsets = [18, 0], sizes = [240, 16], strides = [1, 1]} : vector<280x16xbf16> to vector<240x16xbf16>
    %7 = vector.extract_strided_slice %2 {offsets = [19, 0], sizes = [240, 16], strides = [1, 1]} : vector<280x16xbf16> to vector<240x16xbf16>
    %8 = vector.extract_strided_slice %2 {offsets = [20, 0], sizes = [240, 16], strides = [1, 1]} : vector<280x16xbf16> to vector<240x16xbf16>
    %9 = vector.extract_strided_slice %2 {offsets = [36, 0], sizes = [240, 16], strides = [1, 1]} : vector<280x16xbf16> to vector<240x16xbf16>
    %10 = vector.extract_strided_slice %2 {offsets = [37, 0], sizes = [240, 16], strides = [1, 1]} : vector<280x16xbf16> to vector<240x16xbf16>
    %11 = vector.extract_strided_slice %2 {offsets = [38, 0], sizes = [240, 16], strides = [1, 1]} : vector<280x16xbf16> to vector<240x16xbf16>
    %12 = tpu.concatenate %3, %4, %5, %6, %7, %8, %9, %10, %11 in 1 : vector<240x16xbf16>, vector<240x16xbf16>, vector<240x16xbf16>, vector<240x16xbf16>, vector<240x16xbf16>, vector<240x16xbf16>, vector<240x16xbf16>, vector<240x16xbf16>, vector<240x16xbf16> -> vector<240x144xbf16>
    %c0_3 = arith.constant 0 : index
    %c0_4 = arith.constant 0 : index
    %13 = vector.load %arg3[%c0_3, %c0_4] : memref<144x32xbf16, #tpu.memory_space<vmem>>, vector<144x32xbf16>
    %cst = arith.constant dense<0.000000e+00> : vector<240x32xf32>
    %14 = tpu.matmul %12, %13, %cst {dimension_numbers = #tpu.dot_dimension_numbers<[1], [0], [0], [1], [0, 0, 1, 1], [], []>} : vector<240x144xbf16>, vector<144x32xbf16>, vector<240x32xf32> -> vector<240x32xf32>
    %c0_5 = arith.constant 0 : index
    %c0_6 = arith.constant 0 : index
    %15 = vector.load %arg4[%c0_5, %c0_6] : memref<1x32xf32, #tpu.memory_space<vmem>>, vector<1x32xf32>
    %16 = vector.broadcast %15 : vector<1x32xf32> to vector<240x32xf32>
    %17 = arith.addf %14, %16 : vector<240x32xf32>
    %c0_7 = arith.constant 0 : index
    %c0_8 = arith.constant 0 : index
    %18 = vector.load %arg6[%c0_7, %c0_8] : memref<240x32xf32, #tpu.memory_space<vmem>>, vector<240x32xf32>
    tpu.vector_store %arg6[%c0_7, %c0_8], %17 {strides = array<i32>} : memref<240x32xf32, #tpu.memory_space<vmem>>, vector<240x32xf32>,
    %c0_9 = arith.constant 0 : index
    %c0_10 = arith.constant 0 : index
    %19 = vector.load %arg5[%c0_9, %c0_10] : memref<240x1xf32, #tpu.memory_space<vmem>>, vector<240x1xf32>
    %20 = vector.broadcast %19 : vector<240x1xf32> to vector<240x32xf32>
    %21 = arith.mulf %17, %20 : vector<240x32xf32>
    %cst_11 = arith.constant dense<0.000000e+00> : vector<32xf32>
    %22 = vector.multi_reduction <add>, %21, %cst_11 [0] : vector<240x32xf32> to vector<32xf32>
    %23 = vector.shape_cast %22 : vector<32xf32> to vector<1x32xf32>
    %24 = arith.mulf %21, %17 : vector<240x32xf32>
    %cst_12 = arith.constant dense<0.000000e+00> : vector<32xf32>
    %25 = vector.multi_reduction <add>, %24, %cst_12 [0] : vector<240x32xf32> to vector<32xf32>
    %26 = vector.shape_cast %25 : vector<32xf32> to vector<1x32xf32>
    %27 = tpu.concatenate %23, %26 in 1 : vector<1x32xf32>, vector<1x32xf32> -> vector<1x64xf32>
    %cst_13 = arith.constant 0.000000e+00 : f32
    %28 = vector.broadcast %cst_13 : f32 to vector<7x64xf32>
    %29 = tpu.concatenate %27, %28 in 0 : vector<1x64xf32>, vector<7x64xf32> -> vector<8x64xf32>
    %c0_14 = arith.constant 0 : index
    %c0_15 = arith.constant 0 : index
    %30 = vector.load %arg7[%c0_14, %c0_15] : memref<8x64xf32, #tpu.memory_space<vmem>>, vector<8x64xf32>
    tpu.vector_store %arg7[%c0_14, %c0_15], %29 {strides = array<i32>} : memref<8x64xf32, #tpu.memory_space<vmem>>, vector<8x64xf32>,
    return
  }
  func.func @transform_0(%arg0: i32) -> (i32, i32) {
    %c0_i32 = arith.constant 0 : i32
    %c0_i32_0 = arith.constant 0 : i32
    return %arg0, %c0_i32 : i32, i32
  }
  func.func @transform_1(%arg0: i32) -> (i32, i32) {
    %c1_i32 = arith.constant 1 : i32
    %0 = arith.addi %arg0, %c1_i32 : i32
    %c6_i32 = arith.constant 6 : i32
    %1 = arith.muli %0, %c6_i32 : i32
    %c0_i32 = arith.constant 0 : i32
    %c0_i32_0 = arith.constant 0 : i32
    return %1, %c0_i32 : i32, i32
  }
  func.func @transform_2(%arg0: i32) -> (i32, i32) {
    %c0_i32 = arith.constant 0 : i32
    %c0_i32_0 = arith.constant 0 : i32
    %c0_i32_1 = arith.constant 0 : i32
    return %c0_i32, %c0_i32_0 : i32, i32
  }
  func.func @transform_3(%arg0: i32) -> (i32, i32) {
    %c0_i32 = arith.constant 0 : i32
    %c0_i32_0 = arith.constant 0 : i32
    %c0_i32_1 = arith.constant 0 : i32
    return %c0_i32, %c0_i32_0 : i32, i32
  }
  func.func @transform_4(%arg0: i32) -> (i32, i32) {
    %c0_i32 = arith.constant 0 : i32
    %c0_i32_0 = arith.constant 0 : i32
    return %arg0, %c0_i32 : i32, i32
  }
  func.func @transform_5(%arg0: i32) -> (i32, i32) {
    %c0_i32 = arith.constant 0 : i32
    %c0_i32_0 = arith.constant 0 : i32
    return %arg0, %c0_i32 : i32, i32
  }
  func.func @transform_6(%arg0: i32) -> (i32, i32) {
    %c0_i32 = arith.constant 0 : i32
    %c0_i32_0 = arith.constant 0 : i32
    return %arg0, %c0_i32 : i32, i32
  }
}

</mosaic_0001>

<llo_original>
// kernel: tpu_custom_call.1
$region0: #{tpu_custom_call.1}
  #allocation0 [shape = 'u32[]', space=smem, size = 0x4, offset = 0x4, fixed_abs, tag = 'smem constant byte address 0x4 - core index']
  #allocation1 [shape = 'u32[144,128]{1,0:T(1,128)}', space=vmem, size = 0x12000, scoped, tag = 'internal scratch']
  %s0 = inlined_call_operand.vmem [shape: bf16[760,16], index: 0, kind: input, shape index: {}]
  %s1 = inlined_call_operand.vmem [shape: bf16[760,16], index: 1, kind: input, shape index: {}]
  %s2 = inlined_call_operand.vmem [shape: bf16[144,32], index: 2, kind: input, shape index: {}]
  %s3 = inlined_call_operand.vmem [shape: f32[1,32], index: 3, kind: input, shape index: {}]
  %s4 = inlined_call_operand.vmem [shape: f32[720,1], index: 4, kind: input, shape index: {}]
  %s5 = inlined_call_operand.vmem [shape: f32[720,32], index: 5, kind: output, shape index: {0}]
  %s6 = inlined_call_operand.hbm [shape: f32[24,64], index: 6, kind: output, shape index: {1}]
  %7 = xla_tuple %s5, %s6
  %s8 = sld [smem:[#allocation0]]
  $region61: #{tpu_custom_call.1} parent=0
    _
  %s10 = ssub.s32 1, %s8
  %s11 = scalar_select 0, %s10, %s8
  $region1: #{tpu_custom_call.1} parent=0
    #allocation2 [shape = 'u8[8192]{0}', space=vmem, size = 0x2000, scoped, tag = 'output window, operand 1']
    #allocation3 [shape = 's32[2]{0}', space=sflag, size = 0x8, scoped, tag = 'scoped memory for tpu_custom_call.1']
    %12 = vsyncpa [#allocation3], 0
    %s13 = scalar_lea.sflag [#allocation3], 1
    %14 = vsyncpa %s13, 0
    loop: start=0, step=1, limit=5
    $region2: #{tpu_custom_call.1} parent=1 // loop_pre_header
      _
    $region3: #{tpu_custom_call.1} parent=1 // loop_header
      %s16 = sphi 0, %s20
      %p17 = scmp.ge.s32.totalorder %s16, 5
      %s26 = sphi 0, %s28
      %s29 = sphi 0, %s26
      %s30 = sphi 0, %s29
      %s46 = sphi 0, %s30
      %s56 = sphi 0, %s58
      %s59 = sphi 0, %s56
      %s60 = sphi 0, %s59
      %s76 = sphi 0, %s60
      %s80 = sphi 0, %s80
      %s82 = sphi 0, %s80
      %s83 = sphi 0, %s82
      %s97 = sphi 0, %s83
      %s101 = sphi 0, %s101
      %s103 = sphi 0, %s101
      %s104 = sphi 0, %s103
      %s118 = sphi 0, %s104
      %s124 = sphi 0, %s126
      %s127 = sphi 0, %s124
      %s128 = sphi 0, %s127
      %s144 = sphi 0, %s128
      %s150 = sphi 0, %s152
      %s153 = sphi 0, %s150
      %s154 = sphi 0, %s153
      %s170 = sphi 0, %s154
      %s176 = sphi 0, %s178
      %s179 = sphi 0, %s176
      %s180 = sphi 0, %s179
      %s196 = sphi 0, %s180
    $region4: #{tpu_custom_call.1} parent=1 // loop_header_branch
      %19 = sbr.rel (%p17) target = $region8
    $region5: #{tpu_custom_call.1} parent=1 // loop_body
      %s21 = ssub.s32 %s16, 1
      %s22 = ssub.s32 %s16, 2
      %s23 = sadd.s32 %s16, 1
      %s24 = ssub.s32 %s16, %s23
      %p25 = scmp.eq.s32.totalorder %s24, 0
      %s27 = sadd.s32 %s26, 1
      %s28 = scalar_select %p25, %s26, %s27
      %p31 = pneg %p25
      %p32 = scmp.eq.s32.totalorder %s16, 2
      %p33 = por %p31, %p32
      %p34 = scmp.ne.s32.totalorder %s26, %s29
      %p35 = scmp.eq.s32.totalorder %s16, 0
      %p36 = por %p34, %p35
      %p37 = scmp.ne.s32.totalorder %s26, %s29
      %p38 = scmp.eq.s32.totalorder %s21, 2
      %p39 = por %p37, %p38
      %p40 = scmp.ne.s32.totalorder %s29, %s30
      %p41 = scmp.eq.s32.totalorder %s21, 0
      %p42 = por %p40, %p41
      %p43 = scmp.ne.s32.totalorder %s29, %s30
      %p44 = scmp.eq.s32.totalorder %s22, 2
      %p45 = por %p43, %p44
      %p47 = scmp.ne.s32.totalorder %s30, %s46
      %p48 = scmp.eq.s32.totalorder %s22, 0
      %p49 = por %p47, %p48
      %s50 = sadd.s32 %s16, 1
      %s51 = smul.u32 %s50, 6
      %s52 = sadd.s32 %s23, 1
      %s53 = smul.u32 %s52, 6
      %s54 = ssub.s32 %s51, %s53
      %p55 = scmp.eq.s32.totalorder %s54, 0
      %s57 = sadd.s32 %s56, 1
      %s58 = scalar_select %p55, %s56, %s57
      %p61 = pneg %p55
      %p62 = scmp.eq.s32.totalorder %s16, 2
      %p63 = por %p61, %p62
      %p64 = scmp.ne.s32.totalorder %s56, %s59
      %p65 = scmp.eq.s32.totalorder %s16, 0
      %p66 = por %p64, %p65
      %p67 = scmp.ne.s32.totalorder %s56, %s59
      %p68 = scmp.eq.s32.totalorder %s21, 2
      %p69 = por %p67, %p68
      %p70 = scmp.ne.s32.totalorder %s59, %s60
      %p71 = scmp.eq.s32.totalorder %s21, 0
      %p72 = por %p70, %p71
      %p73 = scmp.ne.s32.totalorder %s59, %s60
      %p74 = scmp.eq.s32.totalorder %s22, 2
      %p75 = por %p73, %p74
      %p77 = scmp.ne.s32.totalorder %s60, %s76
      %p78 = scmp.eq.s32.totalorder %s22, 0
      %p79 = por %p77, %p78
      %s81 = sadd.s32 %s80, 1
      %p84 = scmp.eq.s32.totalorder %s16, 2
      %p85 = scmp.ne.s32.totalorder %s80, %s82
      %p86 = scmp.eq.s32.totalorder %s16, 0
      %p87 = por %p85, %p86
      %p88 = scmp.ne.s32.totalorder %s80, %s82
      %p89 = scmp.eq.s32.totalorder %s21, 2
      %p90 = por %p88, %p89
      %p91 = scmp.ne.s32.totalorder %s82, %s83
      %p92 = scmp.eq.s32.totalorder %s21, 0
      %p93 = por %p91, %p92
      %p94 = scmp.ne.s32.totalorder %s82, %s83
      %p95 = scmp.eq.s32.totalorder %s22, 2
      %p96 = por %p94, %p95
      %p98 = scmp.ne.s32.totalorder %s83, %s97
      %p99 = scmp.eq.s32.totalorder %s22, 0
      %p100 = por %p98, %p99
      %s102 = sadd.s32 %s101, 1
      %p105 = scmp.eq.s32.totalorder %s16, 2
      %p106 = scmp.ne.s32.totalorder %s101, %s103
      %p107 = scmp.eq.s32.totalorder %s16, 0
      %p108 = por %p106, %p107
      %p109 = scmp.ne.s32.totalorder %s101, %s103
      %p110 = scmp.eq.s32.totalorder %s21, 2
      %p111 = por %p109, %p110
      %p112 = scmp.ne.s32.totalorder %s103, %s104
      %p113 = scmp.eq.s32.totalorder %s21, 0
      %p114 = por %p112, %p113
      %p115 = scmp.ne.s32.totalorder %s103, %s104
      %p116 = scmp.eq.s32.totalorder %s22, 2
      %p117 = por %p115, %p116
      %p119 = scmp.ne.s32.totalorder %s104, %s118
      %p120 = scmp.eq.s32.totalorder %s22, 0
      %p121 = por %p119, %p120
      %s122 = ssub.s32 %s16, %s23
      %p123 = scmp.eq.s32.totalorder %s122, 0
      %s125 = sadd.s32 %s124, 1
      %s126 = scalar_select %p123, %s124, %s125
      %p129 = pneg %p123
      %p130 = scmp.eq.s32.totalorder %s16, 2
      %p131 = por %p129, %p130
      %p132 = scmp.ne.s32.totalorder %s124, %s127
      %p133 = scmp.eq.s32.totalorder %s16, 0
      %p134 = por %p132, %p133
      %p135 = scmp.ne.s32.totalorder %s124, %s127
      %p136 = scmp.eq.s32.totalorder %s21, 2
      %p137 = por %p135, %p136
      %p138 = scmp.ne.s32.totalorder %s127, %s128
      %p139 = scmp.eq.s32.totalorder %s21, 0
      %p140 = por %p138, %p139
      %p141 = scmp.ne.s32.totalorder %s127, %s128
      %p142 = scmp.eq.s32.totalorder %s22, 2
      %p143 = por %p141, %p142
      %p145 = scmp.ne.s32.totalorder %s128, %s144
      %p146 = scmp.eq.s32.totalorder %s22, 0
      %p147 = por %p145, %p146
      %s148 = ssub.s32 %s16, %s23
      %p149 = scmp.eq.s32.totalorder %s148, 0
      %s151 = sadd.s32 %s150, 1
      %s152 = scalar_select %p149, %s150, %s151
      %p155 = pneg %p149
      %p156 = scmp.eq.s32.totalorder %s16, 2
      %p157 = por %p155, %p156
      %p158 = scmp.ne.s32.totalorder %s150, %s153
      %p159 = scmp.eq.s32.totalorder %s16, 0
      %p160 = por %p158, %p159
      %p161 = scmp.ne.s32.totalorder %s150, %s153
      %p162 = scmp.eq.s32.totalorder %s21, 2
      %p163 = por %p161, %p162
      %p164 = scmp.ne.s32.totalorder %s153, %s154
      %p165 = scmp.eq.s32.totalorder %s21, 0
      %p166 = por %p164, %p165
      %p167 = scmp.ne.s32.totalorder %s153, %s154
      %p168 = scmp.eq.s32.totalorder %s22, 2
      %p169 = por %p167, %p168
      %p171 = scmp.ne.s32.totalorder %s154, %s170
      %p172 = scmp.eq.s32.totalorder %s22, 0
      %p173 = por %p171, %p172
      %s174 = ssub.s32 %s16, %s23
      %p175 = scmp.eq.s32.totalorder %s174, 0
      %s177 = sadd.s32 %s176, 1
      %s178 = scalar_select %p175, %s176, %s177
      %p181 = pneg %p175
      %p182 = scmp.eq.s32.totalorder %s16, 2
      %p183 = por %p181, %p182
      %p184 = scmp.ne.s32.totalorder %s176, %s179
      %p185 = scmp.eq.s32.totalorder %s16, 0
      %p186 = por %p184, %p185
      %p187 = scmp.ne.s32.totalorder %s176, %s179
      %p188 = scmp.eq.s32.totalorder %s21, 2
      %p189 = por %p187, %p188
      %p190 = scmp.ne.s32.totalorder %s179, %s180
      %p191 = scmp.eq.s32.totalorder %s21, 0
      %p192 = por %p190, %p191
      %p193 = scmp.ne.s32.totalorder %s179, %s180
      %p194 = scmp.eq.s32.totalorder %s22, 2
      %p195 = por %p193, %p194
      %p197 = scmp.ne.s32.totalorder %s180, %s196
      %p198 = scmp.eq.s32.totalorder %s22, 0
      %p199 = por %p197, %p198
      %p200 = scmp.le.s32.totalorder 1, %s16
      %p201 = scmp.lt.s32.totalorder %s16, 4
      %p202 = pnand %p200, %p201
      %p203 = pneg %p202
      // Predicated region
      $region9: #{tpu_custom_call.1} parent=5 // pred_check
        _
      $region10: #{tpu_custom_call.1} parent=5 // pred_check_branch
        %205 = sbr.rel (%p202) target = $region12
      $region11: #{tpu_custom_call.1} parent=5 // pred_region
        %s206 = ssub.s32 %s16, 1
        // Predicated region
        $region13: #{tpu_custom_call.1} parent=11 // pred_check
          %p207 = pneg %p93
        $region14: #{tpu_custom_call.1} parent=11 // pred_check_branch
          %209 = sbr.rel (%p207) target = $region16
        $region15: #{tpu_custom_call.1} parent=11 // pred_region
          _
        $region16: #{tpu_custom_call.1} parent=11 // pred_fallthru
          _
        // Predicated region
        $region17: #{tpu_custom_call.1} parent=11 // pred_check
          %p210 = pneg %p114
        $region18: #{tpu_custom_call.1} parent=11 // pred_check_branch
          %212 = sbr.rel (%p210) target = $region20
        $region19: #{tpu_custom_call.1} parent=11 // pred_region
          _
        $region20: #{tpu_custom_call.1} parent=11 // pred_fallthru
          _
      $region12: #{tpu_custom_call.1} parent=5 // pred_fallthru
        _
      %p213 = scmp.lt.s32.totalorder %s16, 3
      // Predicated region
      $region21: #{tpu_custom_call.1} parent=5 // pred_check
        %p214 = pneg %p213
      $region22: #{tpu_custom_call.1} parent=5 // pred_check_branch
        %216 = sbr.rel (%p214) target = $region24
      $region23: #{tpu_custom_call.1} parent=5 // pred_region
        // Predicated region
        $region25: #{tpu_custom_call.1} parent=23 // pred_check
          %p217 = pneg %p36
        $region26: #{tpu_custom_call.1} parent=23 // pred_check_branch
          %219 = sbr.rel (%p217) target = $region28
        $region27: #{tpu_custom_call.1} parent=23 // pred_region
          %s220 = smul.u32 30, %s16
          %s221 = ssub.s32 95, %s220
          %p222 = scmp.lt.s32.totalorder %s221, 30
          %s223 = scalar_select %p222, %s221, 30
          %s224 = smul.u32 64, %s223
          %p225 = scmp.lt.s32.totalorder %s220, 94
          %s226 = scalar_select %p225, %s220, 94
          %s227 = smul.addr %s226, 4
          %s228 = scalar_lea.vmem %s0, %s227
          %s229 = smul.u32 30, %s16
          %s230 = ssub.s32 95, %s229
          %p231 = scmp.lt.s32.totalorder %s230, 30
          %s232 = scalar_select %p231, %s230, 30
          %s233 = smul.u32 64, %s232
        $region28: #{tpu_custom_call.1} parent=23 // pred_fallthru
          _
        // Predicated region
        $region29: #{tpu_custom_call.1} parent=23 // pred_check
          %p234 = pneg %p66
        $region30: #{tpu_custom_call.1} parent=23 // pred_check_branch
          %236 = sbr.rel (%p234) target = $region32
        $region31: #{tpu_custom_call.1} parent=23 // pred_region
          %s237 = sadd.s32 %s16, 1
          %s238 = smul.u32 %s237, 6
          %s239 = smul.u32 5, %s238
          %p240 = scmp.lt.s32.totalorder %s239, 94
          %s241 = scalar_select %p240, %s239, 94
          %s242 = smul.addr %s241, 4
          %s243 = scalar_lea.vmem %s1, %s242
          %s244 = sadd.s32 %s16, 1
          %s245 = smul.u32 %s244, 6
          %s246 = smul.u32 5, %s245
        $region32: #{tpu_custom_call.1} parent=23 // pred_fallthru
          _
        // Predicated region
        $region33: #{tpu_custom_call.1} parent=23 // pred_check
          %p247 = pneg %p134
        $region34: #{tpu_custom_call.1} parent=23 // pred_check_branch
          %249 = sbr.rel (%p247) target = $region36
        $region35: #{tpu_custom_call.1} parent=23 // pred_region
          %s250 = smul.u32 30, %s16
          %p251 = scmp.lt.s32.totalorder %s250, 89
          %s252 = scalar_select %p251, %s250, 89
          %s253 = smul.addr %s252, 8
          %s254 = scalar_lea.vmem %s4, %s253
          %s255 = smul.u32 30, %s16
        $region36: #{tpu_custom_call.1} parent=23 // pred_fallthru
          _
      $region24: #{tpu_custom_call.1} parent=5 // pred_fallthru
        _
      %p256 = scmp.le.s32.totalorder 1, %s16
      %p257 = scmp.lt.s32.totalorder %s16, 4
      %p258 = pnand %p256, %p257
      %p259 = pneg %p258
      // Predicated region
      $region37: #{tpu_custom_call.1} parent=5 // pred_check
        _
      $region38: #{tpu_custom_call.1} parent=5 // pred_check_branch
        %261 = sbr.rel (%p258) target = $region40
      $region39: #{tpu_custom_call.1} parent=5 // pred_region
        %s262 = ssub.s32 %s16, 1
        %s263 = smul.u32 30, %s21
        %s264 = ssub.s32 95, %s263
        %p265 = scmp.lt.s32.totalorder %s264, 30
        %s266 = scalar_select %p265, %s264, 30
        %s267 = smul.u32 64, %s266
        %p268 = scmp.lt.s32.totalorder %s263, 94
        %s269 = scalar_select %p268, %s263, 94
        %s270 = smul.addr %s269, 4
        %s271 = scalar_lea.vmem %s0, %s270
        %p272 = pneg %p42
        %p273 = pneg %p39
        %s274 = sadd.s32 %s21, 1
        %s275 = smul.u32 %s274, 6
        %s276 = smul.u32 5, %s275
        %p277 = scmp.lt.s32.totalorder %s276, 94
        %s278 = scalar_select %p277, %s276, 94
        %s279 = smul.addr %s278, 4
        %s280 = scalar_lea.vmem %s1, %s279
        %p281 = pneg %p72
        %p282 = pneg %p69
        %p283 = pneg %p93
        %p284 = pneg %p90
        %p285 = pneg %p114
        %p286 = pneg %p111
        %s287 = smul.u32 30, %s21
        %p288 = scmp.lt.s32.totalorder %s287, 89
        %s289 = scalar_select %p288, %s287, 89
        %s290 = smul.addr %s289, 8
        %s291 = scalar_lea.vmem %s4, %s290
        %p292 = pneg %p140
        %p293 = pneg %p137
        %p294 = pneg %p166
        %p295 = pneg %p163
        %s296 = smul.u32 30, %s21
        %p297 = scmp.lt.s32.totalorder %s296, 89
        %s298 = scalar_select %p297, %s296, 89
        %s299 = smul.addr %s298, 8
        %s300 = scalar_lea.vmem %s5, %s299
        %p301 = pneg %p192
        %p302 = pneg %p189
        %s303 = sand.u32 %s179, 1
        %s304 = scalar_lea.sflag [#allocation3], %s303
        %s305 = sand.u32 %s179, 1
        %s306 = smul.addr %s305, 8
        %s307 = scalar_lea.vmem [#allocation2], %s306
        %s308 = smul.u32 30, %s21
        %s309 = ssub.s32 95, %s308
        %p310 = scmp.lt.s32.totalorder %s309, 30
        %s311 = scalar_select %p310, %s309, 30
        %s312 = smul.u32 64, %s311
        %p313 = scmp.lt.s32.totalorder %s308, 94
        %s314 = scalar_select %p313, %s308, 94
        %s315 = smul.addr %s314, 4
        %s316 = scalar_lea.vmem %s0, %s315
        %s317 = smul.u32 30, %s21
        %s318 = ssub.s32 95, %s317
        %p319 = scmp.lt.s32.totalorder %s318, 30
        %s320 = scalar_select %p319, %s318, 30
        %s321 = smul.u32 64, %s320
        %s322 = sadd.s32 %s21, 1
        %s323 = smul.u32 %s322, 6
        %s324 = smul.u32 5, %s323
        %p325 = scmp.lt.s32.totalorder %s324, 94
        %s326 = scalar_select %p325, %s324, 94
        %s327 = smul.addr %s326, 4
        %s328 = scalar_lea.vmem %s1, %s327
        %s329 = sadd.s32 %s21, 1
        %s330 = smul.u32 %s329, 6
        %s331 = smul.u32 5, %s330
        %s332 = smul.u32 30, %s21
        %p333 = scmp.lt.s32.totalorder %s332, 89
        %s334 = scalar_select %p333, %s332, 89
        %s335 = smul.addr %s334, 8
        %s336 = scalar_lea.vmem %s4, %s335
        %s337 = smul.u32 30, %s21
        %s338 = smul.u32 30, %s21
        %p339 = scmp.lt.s32.totalorder %s338, 89
        %s340 = scalar_select %p339, %s338, 89
        %s341 = smul.addr %s340, 8
        %s342 = scalar_lea.vmem %s5, %s341
        %s343 = smul.u32 30, %s21
        %v345 = vld [vmem:[%s316] sm:$0xf]
        %v346 = vld [vmem:[%s316 + $0x4] sm:$0xf]
        %v347 = vld [vmem:[%s316 + $0x8] sm:$0xf]
        %v348 = vld [vmem:[%s316 + $0xc] sm:$0xf]
        %v349 = vld [vmem:[%s316 + $0x10] sm:$0xf]
        %v350 = vld [vmem:[%s316 + $0x14] sm:$0xf]
        %v351 = vld [vmem:[%s316 + $0x18] sm:$0xf]
        %v352 = vld [vmem:[%s316 + $0x1c] sm:$0xf]
        %v353 = vld [vmem:[%s316 + $0x20] sm:$0xf]
        %v354 = vld [vmem:[%s316 + $0x24] sm:$0xf]
        %v355 = vld [vmem:[%s316 + $0x28] sm:$0xf]
        %v356 = vld [vmem:[%s316 + $0x2c] sm:$0xf]
        %v357 = vld [vmem:[%s316 + $0x30] sm:$0xf]
        %v358 = vld [vmem:[%s316 + $0x34] sm:$0xf]
        %v359 = vld [vmem:[%s316 + $0x38] sm:$0xf]
        %v360 = vld [vmem:[%s316 + $0x3c] sm:$0xf]
        %v361 = vld [vmem:[%s316 + $0x40] sm:$0xf]
        %v362 = vld [vmem:[%s316 + $0x44] sm:$0xf]
        %v363 = vld [vmem:[%s316 + $0x48] sm:$0xf]
        %v364 = vld [vmem:[%s316 + $0x4c] sm:$0xf]
        %v365 = vld [vmem:[%s316 + $0x50] sm:$0xf]
        %v366 = vld [vmem:[%s316 + $0x54] sm:$0xf]
        %v367 = vld [vmem:[%s316 + $0x58] sm:$0xf]
        %v368 = vld [vmem:[%s316 + $0x5c] sm:$0xf]
        %v369 = vld [vmem:[%s316 + $0x60] sm:$0xf]
        %v370 = vld [vmem:[%s316 + $0x64] sm:$0xf]
        %v371 = vld [vmem:[%s316 + $0x68] sm:$0xf]
        %v372 = vld [vmem:[%s316 + $0x6c] sm:$0xf]
        %v373 = vld [vmem:[%s316 + $0x70] sm:$0xf]
        %v374 = vld [vmem:[%s316 + $0x74] sm:$0xf]
        %v375 = vld [vmem:[%s328] sm:$0xf]
        %v376 = vld [vmem:[%s328 + $0x4] sm:$0xf]
        %v377 = vld [vmem:[%s328 + $0x8] sm:$0xf]
        %v378 = vld [vmem:[%s328 + $0xc] sm:$0xf]
        %v379 = vld [vmem:[%s328 + $0x10] sm:$0xf]
        %v410 = vunpack.c.l.b16 %v345
        %v411 = vunpack.c.l.b16 %v346
        %v412 = vunpack.c.l.b16 %v347
        %v413 = vunpack.c.l.b16 %v348
        %v414 = vunpack.c.l.b16 %v349
        %v415 = vunpack.c.l.b16 %v350
        %v416 = vunpack.c.l.b16 %v351
        %v417 = vunpack.c.l.b16 %v352
        %v418 = vunpack.c.l.b16 %v353
        %v419 = vunpack.c.l.b16 %v354
        %v420 = vunpack.c.l.b16 %v355
        %v421 = vunpack.c.l.b16 %v356
        %v422 = vunpack.c.l.b16 %v357
        %v423 = vunpack.c.l.b16 %v358
        %v424 = vunpack.c.l.b16 %v359
        %v425 = vunpack.c.l.b16 %v360
        %v426 = vunpack.c.l.b16 %v361
        %v427 = vunpack.c.l.b16 %v362
        %v428 = vunpack.c.l.b16 %v363
        %v429 = vunpack.c.l.b16 %v364
        %v430 = vunpack.c.l.b16 %v365
        %v431 = vunpack.c.l.b16 %v366
        %v432 = vunpack.c.l.b16 %v367
        %v433 = vunpack.c.l.b16 %v368
        %v434 = vunpack.c.l.b16 %v369
        %v435 = vunpack.c.l.b16 %v370
        %v436 = vunpack.c.l.b16 %v371
        %v437 = vunpack.c.l.b16 %v372
        %v438 = vunpack.c.l.b16 %v373
        %v439 = vunpack.c.l.b16 %v374
        %v440 = vpack.c.b16 %v411, %v410
        %v441 = vpack.c.b16 %v413, %v412
        %v442 = vpack.c.b16 %v415, %v414
        %v443 = vpack.c.b16 %v417, %v416
        %v444 = vpack.c.b16 %v419, %v418
        %v445 = vpack.c.b16 %v421, %v420
        %v446 = vpack.c.b16 %v423, %v422
        %v447 = vpack.c.b16 %v425, %v424
        %v448 = vpack.c.b16 %v427, %v426
        %v449 = vpack.c.b16 %v429, %v428
        %v450 = vpack.c.b16 %v431, %v430
        %v451 = vpack.c.b16 %v433, %v432
        %v452 = vpack.c.b16 %v435, %v434
        %v453 = vpack.c.b16 %v437, %v436
        %v454 = vpack.c.b16 %v439, %v438
        %v460 = vunpack.c.l.b16 %v375
        %v461 = vunpack.c.l.b16 %v376
        %v462 = vunpack.c.l.b16 %v377
        %v463 = vunpack.c.l.b16 %v378
        %v464 = vunpack.c.l.b16 %v379
        %v465 = vpack.c.b16 %v461, %v460
        %v466 = vpack.c.b16 %v463, %v462
        %v467 = vpack.c.b16 %v464, %v464
        %vm468 = vsmask.f32 7424
        %v470 = vshrl.u32 %v440, 16
        %v472 = vshll.u32 %v440, 16
        %v474 = vrot.slane %v472, 1
        %v475 = vor.u32 %v470, %v474
        %v477 = vshll.u32 %v441, 16
        %v479 = vrot.slane %v477, 1
        %v480 = vsel %vm468, %v475, %v479
        %v481 = vshrl.u32 %v441, 16
        %v483 = vor.u32 %v481, %v479
        %v485 = vshll.u32 %v442, 16
        %v487 = vrot.slane %v485, 1
        %v488 = vsel %vm468, %v483, %v487
        %v489 = vshrl.u32 %v442, 16
        %v491 = vor.u32 %v489, %v487
        %v493 = vshll.u32 %v443, 16
        %v495 = vrot.slane %v493, 1
        %v496 = vsel %vm468, %v491, %v495
        %v497 = vshrl.u32 %v443, 16
        %v499 = vor.u32 %v497, %v495
        %v501 = vshll.u32 %v444, 16
        %v503 = vrot.slane %v501, 1
        %v504 = vsel %vm468, %v499, %v503
        %v505 = vshrl.u32 %v444, 16
        %v507 = vor.u32 %v505, %v503
        %v509 = vshll.u32 %v445, 16
        %v511 = vrot.slane %v509, 1
        %v512 = vsel %vm468, %v507, %v511
        %v513 = vshrl.u32 %v445, 16
        %v515 = vor.u32 %v513, %v511
        %v517 = vshll.u32 %v446, 16
        %v519 = vrot.slane %v517, 1
        %v520 = vsel %vm468, %v515, %v519
        %v521 = vshrl.u32 %v446, 16
        %v523 = vor.u32 %v521, %v519
        %v525 = vshll.u32 %v447, 16
        %v527 = vrot.slane %v525, 1
        %v528 = vsel %vm468, %v523, %v527
        %v529 = vshrl.u32 %v447, 16
        %v531 = vor.u32 %v529, %v527
        %v533 = vshll.u32 %v448, 16
        %v535 = vrot.slane %v533, 1
        %v536 = vsel %vm468, %v531, %v535
        %v537 = vshrl.u32 %v448, 16
        %v539 = vor.u32 %v537, %v535
        %v541 = vshll.u32 %v449, 16
        %v543 = vrot.slane %v541, 1
        %v544 = vsel %vm468, %v539, %v543
        %v545 = vshrl.u32 %v449, 16
        %v547 = vor.u32 %v545, %v543
        %v549 = vshll.u32 %v450, 16
        %v551 = vrot.slane %v549, 1
        %v552 = vsel %vm468, %v547, %v551
        %v553 = vshrl.u32 %v450, 16
        %v555 = vor.u32 %v553, %v551
        %v557 = vshll.u32 %v451, 16
        %v559 = vrot.slane %v557, 1
        %v560 = vsel %vm468, %v555, %v559
        %v561 = vshrl.u32 %v451, 16
        %v563 = vor.u32 %v561, %v559
        %v565 = vshll.u32 %v452, 16
        %v567 = vrot.slane %v565, 1
        %v568 = vsel %vm468, %v563, %v567
        %v569 = vshrl.u32 %v452, 16
        %v571 = vor.u32 %v569, %v567
        %v573 = vshll.u32 %v453, 16
        %v575 = vrot.slane %v573, 1
        %v576 = vsel %vm468, %v571, %v575
        %v577 = vshrl.u32 %v453, 16
        %v579 = vor.u32 %v577, %v575
        %v581 = vshll.u32 %v454, 16
        %v583 = vrot.slane %v581, 1
        %v584 = vsel %vm468, %v579, %v583
        %v585 = vshrl.u32 %v454, 16
        %v587 = vor.u32 %v585, %v583
        %v589 = vshll.u32 %v465, 16
        %v591 = vrot.slane %v589, 1
        %v592 = vsel %vm468, %v587, %v591
        %593 = vrot.lane.b32.xlu0 %v480, 16
        %v594 = vpop.permute.xlu0 %593
        %595 = vrot.lane.b32.xlu0 %v488, 16
        %v596 = vpop.permute.xlu0 %595
        %597 = vrot.lane.b32.xlu0 %v496, 16
        %v598 = vpop.permute.xlu0 %597
        %599 = vrot.lane.b32.xlu0 %v504, 16
        %v600 = vpop.permute.xlu0 %599
        %601 = vrot.lane.b32.xlu0 %v512, 16
        %v602 = vpop.permute.xlu0 %601
        %603 = vrot.lane.b32.xlu0 %v520, 16
        %v604 = vpop.permute.xlu0 %603
        %605 = vrot.lane.b32.xlu0 %v528, 16
        %v606 = vpop.permute.xlu0 %605
        %607 = vrot.lane.b32.xlu0 %v536, 16
        %v608 = vpop.permute.xlu0 %607
        %609 = vrot.lane.b32.xlu0 %v544, 16
        %v610 = vpop.permute.xlu0 %609
        %611 = vrot.lane.b32.xlu0 %v552, 16
        %v612 = vpop.permute.xlu0 %611
        %613 = vrot.lane.b32.xlu0 %v560, 16
        %v614 = vpop.permute.xlu0 %613
        %615 = vrot.lane.b32.xlu0 %v568, 16
        %v616 = vpop.permute.xlu0 %615
        %617 = vrot.lane.b32.xlu0 %v576, 16
        %v618 = vpop.permute.xlu0 %617
        %619 = vrot.lane.b32.xlu0 %v584, 16
        %v620 = vpop.permute.xlu0 %619
        %621 = vrot.lane.b32.xlu0 %v592, 16
        %v622 = vpop.permute.xlu0 %621
        %vm623 = vcmask 1046528
        %v624 = vrot.slane %v440, 1
        %v625 = vrot.slane %v441, 1
        %v626 = vsel %vm623, %v624, %v625
        %v627 = vrot.slane %v442, 1
        %v628 = vsel %vm623, %v625, %v627
        %v629 = vrot.slane %v443, 1
        %v630 = vsel %vm623, %v627, %v629
        %v631 = vrot.slane %v444, 1
        %v632 = vsel %vm623, %v629, %v631
        %v633 = vrot.slane %v445, 1
        %v634 = vsel %vm623, %v631, %v633
        %v635 = vrot.slane %v446, 1
        %v636 = vsel %vm623, %v633, %v635
        %v637 = vrot.slane %v447, 1
        %v638 = vsel %vm623, %v635, %v637
        %v639 = vrot.slane %v448, 1
        %v640 = vsel %vm623, %v637, %v639
        %v641 = vrot.slane %v449, 1
        %v642 = vsel %vm623, %v639, %v641
        %v643 = vrot.slane %v450, 1
        %v644 = vsel %vm623, %v641, %v643
        %v645 = vrot.slane %v451, 1
        %v646 = vsel %vm623, %v643, %v645
        %v647 = vrot.slane %v452, 1
        %v648 = vsel %vm623, %v645, %v647
        %v649 = vrot.slane %v453, 1
        %v650 = vsel %vm623, %v647, %v649
        %v651 = vrot.slane %v454, 1
        %v652 = vsel %vm623, %v649, %v651
        %v653 = vrot.slane %v465, 1
        %v654 = vsel %vm623, %v651, %v653
        %655 = vrot.lane.b32.xlu0 %v626, 32
        %v656 = vpop.permute.xlu0 %655
        %657 = vrot.lane.b32.xlu0 %v628, 32
        %v658 = vpop.permute.xlu0 %657
        %659 = vrot.lane.b32.xlu0 %v630, 32
        %v660 = vpop.permute.xlu0 %659
        %661 = vrot.lane.b32.xlu0 %v632, 32
        %v662 = vpop.permute.xlu0 %661
        %663 = vrot.lane.b32.xlu0 %v634, 32
        %v664 = vpop.permute.xlu0 %663
        %665 = vrot.lane.b32.xlu0 %v636, 32
        %v666 = vpop.permute.xlu0 %665
        %667 = vrot.lane.b32.xlu0 %v638, 32
        %v668 = vpop.permute.xlu0 %667
        %669 = vrot.lane.b32.xlu0 %v640, 32
        %v670 = vpop.permute.xlu0 %669
        %671 = vrot.lane.b32.xlu0 %v642, 32
        %v672 = vpop.permute.xlu0 %671
        %673 = vrot.lane.b32.xlu0 %v644, 32
        %v674 = vpop.permute.xlu0 %673
        %675 = vrot.lane.b32.xlu0 %v646, 32
        %v676 = vpop.permute.xlu0 %675
        %677 = vrot.lane.b32.xlu0 %v648, 32
        %v678 = vpop.permute.xlu0 %677
        %679 = vrot.lane.b32.xlu0 %v650, 32
        %v680 = vpop.permute.xlu0 %679
        %681 = vrot.lane.b32.xlu0 %v652, 32
        %v682 = vpop.permute.xlu0 %681
        %683 = vrot.lane.b32.xlu0 %v654, 32
        %v684 = vpop.permute.xlu0 %683
        %v685 = vrot.slane %v466, 1
        %v686 = vsel %vm623, %v653, %v685
        %687 = vrot.lane.b32.xlu0 %v628, 48
        %v688 = vpop.permute.xlu0 %687
        %689 = vrot.lane.b32.xlu0 %v630, 48
        %v690 = vpop.permute.xlu0 %689
        %691 = vrot.lane.b32.xlu0 %v632, 48
        %v692 = vpop.permute.xlu0 %691
        %693 = vrot.lane.b32.xlu0 %v634, 48
        %v694 = vpop.permute.xlu0 %693
        %695 = vrot.lane.b32.xlu0 %v636, 48
        %v696 = vpop.permute.xlu0 %695
        %697 = vrot.lane.b32.xlu0 %v638, 48
        %v698 = vpop.permute.xlu0 %697
        %699 = vrot.lane.b32.xlu0 %v640, 48
        %v700 = vpop.permute.xlu0 %699
        %701 = vrot.lane.b32.xlu0 %v642, 48
        %v702 = vpop.permute.xlu0 %701
        %703 = vrot.lane.b32.xlu0 %v644, 48
        %v704 = vpop.permute.xlu0 %703
        %705 = vrot.lane.b32.xlu0 %v646, 48
        %v706 = vpop.permute.xlu0 %705
        %707 = vrot.lane.b32.xlu0 %v648, 48
        %v708 = vpop.permute.xlu0 %707
        %709 = vrot.lane.b32.xlu0 %v650, 48
        %v710 = vpop.permute.xlu0 %709
        %711 = vrot.lane.b32.xlu0 %v652, 48
        %v712 = vpop.permute.xlu0 %711
        %713 = vrot.lane.b32.xlu0 %v654, 48
        %v714 = vpop.permute.xlu0 %713
        %715 = vrot.lane.b32.xlu0 %v686, 48
        %v716 = vpop.permute.xlu0 %715
        %vm717 = vsmask.f32 6400
        %v718 = vrot.slane %v481, 1
        %v719 = vrot.slane %v477, 2
        %v720 = vor.u32 %v718, %v719
        %v721 = vrot.slane %v489, 1
        %v722 = vrot.slane %v485, 2
        %v723 = vor.u32 %v721, %v722
        %v724 = vsel %vm717, %v720, %v723
        %v725 = vrot.slane %v497, 1
        %v726 = vrot.slane %v493, 2
        %v727 = vor.u32 %v725, %v726
        %v728 = vsel %vm717, %v723, %v727
        %v729 = vrot.slane %v505, 1
        %v730 = vrot.slane %v501, 2
        %v731 = vor.u32 %v729, %v730
        %v732 = vsel %vm717, %v727, %v731
        %v733 = vrot.slane %v513, 1
        %v734 = vrot.slane %v509, 2
        %v735 = vor.u32 %v733, %v734
        %v736 = vsel %vm717, %v731, %v735
        %v737 = vrot.slane %v521, 1
        %v738 = vrot.slane %v517, 2
        %v739 = vor.u32 %v737, %v738
        %v740 = vsel %vm717, %v735, %v739
        %v741 = vrot.slane %v529, 1
        %v742 = vrot.slane %v525, 2
        %v743 = vor.u32 %v741, %v742
        %v744 = vsel %vm717, %v739, %v743
        %v745 = vrot.slane %v537, 1
        %v746 = vrot.slane %v533, 2
        %v747 = vor.u32 %v745, %v746
        %v748 = vsel %vm717, %v743, %v747
        %v749 = vrot.slane %v545, 1
        %v750 = vrot.slane %v541, 2
        %v751 = vor.u32 %v749, %v750
        %v752 = vsel %vm717, %v747, %v751
        %v753 = vrot.slane %v553, 1
        %v754 = vrot.slane %v549, 2
        %v755 = vor.u32 %v753, %v754
        %v756 = vsel %vm717, %v751, %v755
        %v757 = vrot.slane %v561, 1
        %v758 = vrot.slane %v557, 2
        %v759 = vor.u32 %v757, %v758
        %v760 = vsel %vm717, %v755, %v759
        %v761 = vrot.slane %v569, 1
        %v762 = vrot.slane %v565, 2
        %v763 = vor.u32 %v761, %v762
        %v764 = vsel %vm717, %v759, %v763
        %v765 = vrot.slane %v577, 1
        %v766 = vrot.slane %v573, 2
        %v767 = vor.u32 %v765, %v766
        %v768 = vsel %vm717, %v763, %v767
        %v769 = vrot.slane %v585, 1
        %v770 = vrot.slane %v581, 2
        %v771 = vor.u32 %v769, %v770
        %v772 = vsel %vm717, %v767, %v771
        %v773 = vshrl.u32 %v465, 16
        %v775 = vrot.slane %v773, 1
        %v776 = vrot.slane %v589, 2
        %v777 = vor.u32 %v775, %v776
        %v778 = vsel %vm717, %v771, %v777
        %v780 = vshrl.u32 %v466, 16
        %v782 = vrot.slane %v780, 1
        %v783 = vshll.u32 %v466, 16
        %v785 = vrot.slane %v783, 2
        %v786 = vor.u32 %v782, %v785
        %v787 = vsel %vm717, %v777, %v786
        %788 = vrot.lane.b32.xlu0 %v724, 64
        %v789 = vpop.permute.xlu0 %788
        %790 = vrot.lane.b32.xlu0 %v728, 64
        %v791 = vpop.permute.xlu0 %790
        %792 = vrot.lane.b32.xlu0 %v732, 64
        %v793 = vpop.permute.xlu0 %792
        %794 = vrot.lane.b32.xlu0 %v736, 64
        %v795 = vpop.permute.xlu0 %794
        %796 = vrot.lane.b32.xlu0 %v740, 64
        %v797 = vpop.permute.xlu0 %796
        %798 = vrot.lane.b32.xlu0 %v744, 64
        %v799 = vpop.permute.xlu0 %798
        %800 = vrot.lane.b32.xlu0 %v748, 64
        %v801 = vpop.permute.xlu0 %800
        %802 = vrot.lane.b32.xlu0 %v752, 64
        %v803 = vpop.permute.xlu0 %802
        %804 = vrot.lane.b32.xlu0 %v756, 64
        %v805 = vpop.permute.xlu0 %804
        %806 = vrot.lane.b32.xlu0 %v760, 64
        %v807 = vpop.permute.xlu0 %806
        %808 = vrot.lane.b32.xlu0 %v764, 64
        %v809 = vpop.permute.xlu0 %808
        %810 = vrot.lane.b32.xlu0 %v768, 64
        %v811 = vpop.permute.xlu0 %810
        %812 = vrot.lane.b32.xlu0 %v772, 64
        %v813 = vpop.permute.xlu0 %812
        %814 = vrot.lane.b32.xlu0 %v778, 64
        %v815 = vpop.permute.xlu0 %814
        %816 = vrot.lane.b32.xlu0 %v787, 64
        %v817 = vpop.permute.xlu0 %816
        %vm818 = vcmask 1045504
        %v819 = vrot.slane %v441, 2
        %v820 = vrot.slane %v442, 2
        %v821 = vsel %vm818, %v819, %v820
        %v822 = vrot.slane %v443, 2
        %v823 = vsel %vm818, %v820, %v822
        %v824 = vrot.slane %v444, 2
        %v825 = vsel %vm818, %v822, %v824
        %v826 = vrot.slane %v445, 2
        %v827 = vsel %vm818, %v824, %v826
        %v828 = vrot.slane %v446, 2
        %v829 = vsel %vm818, %v826, %v828
        %v830 = vrot.slane %v447, 2
        %v831 = vsel %vm818, %v828, %v830
        %v832 = vrot.slane %v448, 2
        %v833 = vsel %vm818, %v830, %v832
        %v834 = vrot.slane %v449, 2
        %v835 = vsel %vm818, %v832, %v834
        %v836 = vrot.slane %v450, 2
        %v837 = vsel %vm818, %v834, %v836
        %v838 = vrot.slane %v451, 2
        %v839 = vsel %vm818, %v836, %v838
        %v840 = vrot.slane %v452, 2
        %v841 = vsel %vm818, %v838, %v840
        %v842 = vrot.slane %v453, 2
        %v843 = vsel %vm818, %v840, %v842
        %v844 = vrot.slane %v454, 2
        %v845 = vsel %vm818, %v842, %v844
        %v846 = vrot.slane %v465, 2
        %v847 = vsel %vm818, %v844, %v846
        %v848 = vrot.slane %v466, 2
        %v849 = vsel %vm818, %v846, %v848
        %850 = vrot.lane.b32.xlu0 %v821, 80
        %v851 = vpop.permute.xlu0 %850
        %852 = vrot.lane.b32.xlu0 %v823, 80
        %v853 = vpop.permute.xlu0 %852
        %854 = vrot.lane.b32.xlu0 %v825, 80
        %v855 = vpop.permute.xlu0 %854
        %856 = vrot.lane.b32.xlu0 %v827, 80
        %v857 = vpop.permute.xlu0 %856
        %858 = vrot.lane.b32.xlu0 %v829, 80
        %v859 = vpop.permute.xlu0 %858
        %860 = vrot.lane.b32.xlu0 %v831, 80
        %v861 = vpop.permute.xlu0 %860
        %862 = vrot.lane.b32.xlu0 %v833, 80
        %v863 = vpop.permute.xlu0 %862
        %864 = vrot.lane.b32.xlu0 %v835, 80
        %v865 = vpop.permute.xlu0 %864
        %866 = vrot.lane.b32.xlu0 %v837, 80
        %v867 = vpop.permute.xlu0 %866
        %868 = vrot.lane.b32.xlu0 %v839, 80
        %v869 = vpop.permute.xlu0 %868
        %870 = vrot.lane.b32.xlu0 %v841, 80
        %v871 = vpop.permute.xlu0 %870
        %872 = vrot.lane.b32.xlu0 %v843, 80
        %v873 = vpop.permute.xlu0 %872
        %874 = vrot.lane.b32.xlu0 %v845, 80
        %v875 = vpop.permute.xlu0 %874
        %876 = vrot.lane.b32.xlu0 %v847, 80
        %v877 = vpop.permute.xlu0 %876
        %878 = vrot.lane.b32.xlu0 %v849, 80
        %v879 = vpop.permute.xlu0 %878
        %v880 = vrot.slane %v467, 2
        %v881 = vsel %vm818, %v848, %v880
        %882 = vrot.lane.b32.xlu0 %v823, 96
        %v883 = vpop.permute.xlu0 %882
        %884 = vrot.lane.b32.xlu0 %v825, 96
        %v885 = vpop.permute.xlu0 %884
        %886 = vrot.lane.b32.xlu0 %v827, 96
        %v887 = vpop.permute.xlu0 %886
        %888 = vrot.lane.b32.xlu0 %v829, 96
        %v889 = vpop.permute.xlu0 %888
        %890 = vrot.lane.b32.xlu0 %v831, 96
        %v891 = vpop.permute.xlu0 %890
        %892 = vrot.lane.b32.xlu0 %v833, 96
        %v893 = vpop.permute.xlu0 %892
        %894 = vrot.lane.b32.xlu0 %v835, 96
        %v895 = vpop.permute.xlu0 %894
        %896 = vrot.lane.b32.xlu0 %v837, 96
        %v897 = vpop.permute.xlu0 %896
        %898 = vrot.lane.b32.xlu0 %v839, 96
        %v899 = vpop.permute.xlu0 %898
        %900 = vrot.lane.b32.xlu0 %v841, 96
        %v901 = vpop.permute.xlu0 %900
        %902 = vrot.lane.b32.xlu0 %v843, 96
        %v903 = vpop.permute.xlu0 %902
        %904 = vrot.lane.b32.xlu0 %v845, 96
        %v905 = vpop.permute.xlu0 %904
        %906 = vrot.lane.b32.xlu0 %v847, 96
        %v907 = vpop.permute.xlu0 %906
        %908 = vrot.lane.b32.xlu0 %v849, 96
        %v909 = vpop.permute.xlu0 %908
        %910 = vrot.lane.b32.xlu0 %v881, 96
        %v911 = vpop.permute.xlu0 %910
        %vm912 = vsmask.f32 5376
        %v913 = vrot.slane %v489, 2
        %v914 = vrot.slane %v485, 3
        %v915 = vor.u32 %v913, %v914
        %v916 = vrot.slane %v497, 2
        %v917 = vrot.slane %v493, 3
        %v918 = vor.u32 %v916, %v917
        %v919 = vsel %vm912, %v915, %v918
        %v920 = vrot.slane %v505, 2
        %v921 = vrot.slane %v501, 3
        %v922 = vor.u32 %v920, %v921
        %v923 = vsel %vm912, %v918, %v922
        %v924 = vrot.slane %v513, 2
        %v925 = vrot.slane %v509, 3
        %v926 = vor.u32 %v924, %v925
        %v927 = vsel %vm912, %v922, %v926
        %v928 = vrot.slane %v521, 2
        %v929 = vrot.slane %v517, 3
        %v930 = vor.u32 %v928, %v929
        %v931 = vsel %vm912, %v926, %v930
        %v932 = vrot.slane %v529, 2
        %v933 = vrot.slane %v525, 3
        %v934 = vor.u32 %v932, %v933
        %v935 = vsel %vm912, %v930, %v934
        %v936 = vrot.slane %v537, 2
        %v937 = vrot.slane %v533, 3
        %v938 = vor.u32 %v936, %v937
        %v939 = vsel %vm912, %v934, %v938
        %v940 = vrot.slane %v545, 2
        %v941 = vrot.slane %v541, 3
        %v942 = vor.u32 %v940, %v941
        %v943 = vsel %vm912, %v938, %v942
        %v944 = vrot.slane %v553, 2
        %v945 = vrot.slane %v549, 3
        %v946 = vor.u32 %v944, %v945
        %v947 = vsel %vm912, %v942, %v946
        %v948 = vrot.slane %v561, 2
        %v949 = vrot.slane %v557, 3
        %v950 = vor.u32 %v948, %v949
        %v951 = vsel %vm912, %v946, %v950
        %v952 = vrot.slane %v569, 2
        %v953 = vrot.slane %v565, 3
        %v954 = vor.u32 %v952, %v953
        %v955 = vsel %vm912, %v950, %v954
        %v956 = vrot.slane %v577, 2
        %v957 = vrot.slane %v573, 3
        %v958 = vor.u32 %v956, %v957
        %v959 = vsel %vm912, %v954, %v958
        %v960 = vrot.slane %v585, 2
        %v961 = vrot.slane %v581, 3
        %v962 = vor.u32 %v960, %v961
        %v963 = vsel %vm912, %v958, %v962
        %v964 = vrot.slane %v773, 2
        %v965 = vrot.slane %v589, 3
        %v966 = vor.u32 %v964, %v965
        %v967 = vsel %vm912, %v962, %v966
        %v968 = vrot.slane %v780, 2
        %v969 = vrot.slane %v783, 3
        %v970 = vor.u32 %v968, %v969
        %v971 = vsel %vm912, %v966, %v970
        %v973 = vshrl.u32 %v467, 16
        %v975 = vrot.slane %v973, 2
        %v976 = vshll.u32 %v467, 16
        %v978 = vrot.slane %v976, 3
        %v979 = vor.u32 %v975, %v978
        %v980 = vsel %vm912, %v970, %v979
        %981 = vrot.lane.b32.xlu0 %v919, 112
        %v982 = vpop.permute.xlu0 %981
        %983 = vrot.lane.b32.xlu0 %v923, 112
        %v984 = vpop.permute.xlu0 %983
        %985 = vrot.lane.b32.xlu0 %v927, 112
        %v986 = vpop.permute.xlu0 %985
        %987 = vrot.lane.b32.xlu0 %v931, 112
        %v988 = vpop.permute.xlu0 %987
        %989 = vrot.lane.b32.xlu0 %v935, 112
        %v990 = vpop.permute.xlu0 %989
        %991 = vrot.lane.b32.xlu0 %v939, 112
        %v992 = vpop.permute.xlu0 %991
        %993 = vrot.lane.b32.xlu0 %v943, 112
        %v994 = vpop.permute.xlu0 %993
        %995 = vrot.lane.b32.xlu0 %v947, 112
        %v996 = vpop.permute.xlu0 %995
        %997 = vrot.lane.b32.xlu0 %v951, 112
        %v998 = vpop.permute.xlu0 %997
        %999 = vrot.lane.b32.xlu0 %v955, 112
        %v1000 = vpop.permute.xlu0 %999
        %1001 = vrot.lane.b32.xlu0 %v959, 112
        %v1002 = vpop.permute.xlu0 %1001
        %1003 = vrot.lane.b32.xlu0 %v963, 112
        %v1004 = vpop.permute.xlu0 %1003
        %1005 = vrot.lane.b32.xlu0 %v967, 112
        %v1006 = vpop.permute.xlu0 %1005
        %1007 = vrot.lane.b32.xlu0 %v971, 112
        %v1008 = vpop.permute.xlu0 %1007
        %1009 = vrot.lane.b32.xlu0 %v980, 112
        %v1010 = vpop.permute.xlu0 %1009
        %vm1011 = vcmask 1044480
        %v1012 = vrot.slane %v442, 3
        %v1013 = vrot.slane %v443, 3
        %v1014 = vsel %vm1011, %v1012, %v1013
        %v1015 = vrot.slane %v444, 3
        %v1016 = vsel %vm1011, %v1013, %v1015
        %v1017 = vrot.slane %v445, 3
        %v1018 = vsel %vm1011, %v1015, %v1017
        %v1019 = vrot.slane %v446, 3
        %v1020 = vsel %vm1011, %v1017, %v1019
        %v1021 = vrot.slane %v447, 3
        %v1022 = vsel %vm1011, %v1019, %v1021
        %v1023 = vrot.slane %v448, 3
        %v1024 = vsel %vm1011, %v1021, %v1023
        %v1025 = vrot.slane %v449, 3
        %v1026 = vsel %vm1011, %v1023, %v1025
        %v1027 = vrot.slane %v450, 3
        %v1028 = vsel %vm1011, %v1025, %v1027
        %v1029 = vrot.slane %v451, 3
        %v1030 = vsel %vm1011, %v1027, %v1029
        %v1031 = vrot.slane %v452, 3
        %v1032 = vsel %vm1011, %v1029, %v1031
        %v1033 = vrot.slane %v453, 3
        %v1034 = vsel %vm1011, %v1031, %v1033
        %v1035 = vrot.slane %v454, 3
        %v1036 = vsel %vm1011, %v1033, %v1035
        %v1037 = vrot.slane %v465, 3
        %v1038 = vsel %vm1011, %v1035, %v1037
        %v1039 = vrot.slane %v466, 3
        %v1040 = vsel %vm1011, %v1037, %v1039
        %v1041 = vrot.slane %v467, 3
        %v1042 = vsel %vm1011, %v1039, %v1041
        %vm1043 = vcmask 130048
        %v1045 = vsel %vm1043, %v440, %v594
        %v1047 = vsel %vm1043, %v441, %v596
        %v1049 = vsel %vm1043, %v442, %v598
        %v1051 = vsel %vm1043, %v443, %v600
        %v1053 = vsel %vm1043, %v444, %v602
        %v1055 = vsel %vm1043, %v445, %v604
        %v1057 = vsel %vm1043, %v446, %v606
        %v1059 = vsel %vm1043, %v447, %v608
        %v1061 = vsel %vm1043, %v448, %v610
        %v1063 = vsel %vm1043, %v449, %v612
        %v1065 = vsel %vm1043, %v450, %v614
        %v1067 = vsel %vm1043, %v451, %v616
        %v1069 = vsel %vm1043, %v452, %v618
        %v1071 = vsel %vm1043, %v453, %v620
        %v1073 = vsel %vm1043, %v454, %v622
        %vm1074 = vcmask 261120
        %v1076 = vsel %vm1074, %v1045, %v656
        %v1078 = vsel %vm1074, %v1047, %v658
        %v1080 = vsel %vm1074, %v1049, %v660
        %v1082 = vsel %vm1074, %v1051, %v662
        %v1084 = vsel %vm1074, %v1053, %v664
        %v1086 = vsel %vm1074, %v1055, %v666
        %v1088 = vsel %vm1074, %v1057, %v668
        %v1090 = vsel %vm1074, %v1059, %v670
        %v1092 = vsel %vm1074, %v1061, %v672
        %v1094 = vsel %vm1074, %v1063, %v674
        %v1096 = vsel %vm1074, %v1065, %v676
        %v1098 = vsel %vm1074, %v1067, %v678
        %v1100 = vsel %vm1074, %v1069, %v680
        %v1102 = vsel %vm1074, %v1071, %v682
        %v1104 = vsel %vm1074, %v1073, %v684
        %vm1105 = vcmask 392192
        %v1107 = vsel %vm1105, %v1076, %v688
        %v1109 = vsel %vm1105, %v1078, %v690
        %v1111 = vsel %vm1105, %v1080, %v692
        %v1113 = vsel %vm1105, %v1082, %v694
        %v1115 = vsel %vm1105, %v1084, %v696
        %v1117 = vsel %vm1105, %v1086, %v698
        %v1119 = vsel %vm1105, %v1088, %v700
        %v1121 = vsel %vm1105, %v1090, %v702
        %v1123 = vsel %vm1105, %v1092, %v704
        %v1125 = vsel %vm1105, %v1094, %v706
        %v1127 = vsel %vm1105, %v1096, %v708
        %v1129 = vsel %vm1105, %v1098, %v710
        %v1131 = vsel %vm1105, %v1100, %v712
        %v1133 = vsel %vm1105, %v1102, %v714
        %v1135 = vsel %vm1105, %v1104, %v716
        %vm1136 = vcmask 523264
        %v1138 = vsel %vm1136, %v1107, %v789
        %v1140 = vsel %vm1136, %v1109, %v791
        %v1142 = vsel %vm1136, %v1111, %v793
        %v1144 = vsel %vm1136, %v1113, %v795
        %v1146 = vsel %vm1136, %v1115, %v797
        %v1148 = vsel %vm1136, %v1117, %v799
        %v1150 = vsel %vm1136, %v1119, %v801
        %v1152 = vsel %vm1136, %v1121, %v803
        %v1154 = vsel %vm1136, %v1123, %v805
        %v1156 = vsel %vm1136, %v1125, %v807
        %v1158 = vsel %vm1136, %v1127, %v809
        %v1160 = vsel %vm1136, %v1129, %v811
        %v1162 = vsel %vm1136, %v1131, %v813
        %v1164 = vsel %vm1136, %v1133, %v815
        %v1166 = vsel %vm1136, %v1135, %v817
        %vm1167 = vcmask 654336
        %v1169 = vsel %vm1167, %v1138, %v851
        %v1171 = vsel %vm1167, %v1140, %v853
        %v1173 = vsel %vm1167, %v1142, %v855
        %v1175 = vsel %vm1167, %v1144, %v857
        %v1177 = vsel %vm1167, %v1146, %v859
        %v1179 = vsel %vm1167, %v1148, %v861
        %v1181 = vsel %vm1167, %v1150, %v863
        %v1183 = vsel %vm1167, %v1152, %v865
        %v1185 = vsel %vm1167, %v1154, %v867
        %v1187 = vsel %vm1167, %v1156, %v869
        %v1189 = vsel %vm1167, %v1158, %v871
        %v1191 = vsel %vm1167, %v1160, %v873
        %v1193 = vsel %vm1167, %v1162, %v875
        %v1195 = vsel %vm1167, %v1164, %v877
        %v1197 = vsel %vm1167, %v1166, %v879
        %vm1198 = vcmask 785408
        %v1200 = vsel %vm1198, %v1169, %v883
        %v1202 = vsel %vm1198, %v1171, %v885
        %v1204 = vsel %vm1198, %v1173, %v887
        %v1206 = vsel %vm1198, %v1175, %v889
        %v1208 = vsel %vm1198, %v1177, %v891
        %v1210 = vsel %vm1198, %v1179, %v893
        %v1212 = vsel %vm1198, %v1181, %v895
        %v1214 = vsel %vm1198, %v1183, %v897
        %v1216 = vsel %vm1198, %v1185, %v899
        %v1218 = vsel %vm1198, %v1187, %v901
        %v1220 = vsel %vm1198, %v1189, %v903
        %v1222 = vsel %vm1198, %v1191, %v905
        %v1224 = vsel %vm1198, %v1193, %v907
        %v1226 = vsel %vm1198, %v1195, %v909
        %v1228 = vsel %vm1198, %v1197, %v911
        %vm1229 = vcmask 916480
        %v1231 = vsel %vm1229, %v1200, %v982
        %v1234 = vsel %vm1229, %v1202, %v984
        %v1237 = vsel %vm1229, %v1204, %v986
        %v1240 = vsel %vm1229, %v1206, %v988
        %v1243 = vsel %vm1229, %v1208, %v990
        %v1246 = vsel %vm1229, %v1210, %v992
        %v1249 = vsel %vm1229, %v1212, %v994
        %v1252 = vsel %vm1229, %v1214, %v996
        %v1255 = vsel %vm1229, %v1216, %v998
        %v1258 = vsel %vm1229, %v1218, %v1000
        %v1261 = vsel %vm1229, %v1220, %v1002
        %v1264 = vsel %vm1229, %v1222, %v1004
        %v1267 = vsel %vm1229, %v1224, %v1006
        %v1270 = vsel %vm1229, %v1226, %v1008
        %v1273 = vsel %vm1229, %v1228, %v1010
        %v1275 = vld [vmem:[%s2] sm:$0xf]
        %v1276 = vld [vmem:[%s2 + $0x4] sm:$0xf]
        %v1277 = vld [vmem:[%s2 + $0x8] sm:$0xf]
        %v1278 = vld [vmem:[%s2 + $0xc] sm:$0xf]
        %v1279 = vld [vmem:[%s2 + $0x10] sm:$0xf]
        %v1280 = vld [vmem:[%s2 + $0x14] sm:$0xf]
        %v1281 = vld [vmem:[%s2 + $0x18] sm:$0xf]
        %v1282 = vld [vmem:[%s2 + $0x1c] sm:$0xf]
        %v1283 = vld [vmem:[%s2 + $0x20] sm:$0xf]
        %v1284 = vld [vmem:[%s2 + $0x24] sm:$0xf]
        %v1285 = vld [vmem:[%s2 + $0x28] sm:$0xf]
        %v1286 = vld [vmem:[%s2 + $0x2c] sm:$0xf]
        %v1287 = vld [vmem:[%s2 + $0x30] sm:$0xf]
        %v1288 = vld [vmem:[%s2 + $0x34] sm:$0xf]
        %v1289 = vld [vmem:[%s2 + $0x38] sm:$0xf]
        %v1290 = vld [vmem:[%s2 + $0x3c] sm:$0xf]
        %v1291 = vld [vmem:[%s2 + $0x40] sm:$0xf]
        %v1292 = vld [vmem:[%s2 + $0x44] sm:$0xf]
        %v1293 = vld [vmem:[%s3] sm:$0x1]
        %v1295 = vlaneseq
        %v1296 = vshrl.u32 %v1295, 7
        %v1297 = vsub.s32 0, %v1296
        %v1298 = vrot.slane %v1293, %v1297
        %v1318 = vunpack.c.l.b16 %v1275
        %v1319 = vunpack.c.l.b16 %v1276
        %v1320 = vunpack.c.l.b16 %v1277
        %v1321 = vunpack.c.l.b16 %v1278
        %v1322 = vunpack.c.l.b16 %v1279
        %v1323 = vunpack.c.l.b16 %v1280
        %v1324 = vunpack.c.l.b16 %v1281
        %v1325 = vunpack.c.l.b16 %v1282
        %v1326 = vunpack.c.l.b16 %v1283
        %v1327 = vunpack.c.l.b16 %v1284
        %v1328 = vunpack.c.l.b16 %v1285
        %v1329 = vunpack.c.l.b16 %v1286
        %v1330 = vunpack.c.l.b16 %v1287
        %v1331 = vunpack.c.l.b16 %v1288
        %v1332 = vunpack.c.l.b16 %v1289
        %v1333 = vunpack.c.l.b16 %v1290
        %v1334 = vunpack.c.l.b16 %v1291
        %v1335 = vunpack.c.l.b16 %v1292
        %v1336 = vpack.c.b16 %v1319, %v1318
        %v1337 = vpack.c.b16 %v1321, %v1320
        %v1338 = vpack.c.b16 %v1323, %v1322
        %v1339 = vpack.c.b16 %v1325, %v1324
        %v1340 = vpack.c.b16 %v1327, %v1326
        %v1341 = vpack.c.b16 %v1329, %v1328
        %v1342 = vpack.c.b16 %v1331, %v1330
        %v1343 = vpack.c.b16 %v1333, %v1332
        %v1344 = vpack.c.b16 %v1335, %v1334
        %v1355 = vsel %vm1043, %v1014, 0
        %v1358 = vsel %vm1043, %v1016, 0
        %v1361 = vsel %vm1043, %v1018, 0
        %v1364 = vsel %vm1043, %v1020, 0
        %v1367 = vsel %vm1043, %v1022, 0
        %v1370 = vsel %vm1043, %v1024, 0
        %v1373 = vsel %vm1043, %v1026, 0
        %v1376 = vsel %vm1043, %v1028, 0
        %v1379 = vsel %vm1043, %v1030, 0
        %v1382 = vsel %vm1043, %v1032, 0
        %v1385 = vsel %vm1043, %v1034, 0
        %v1388 = vsel %vm1043, %v1036, 0
        %v1391 = vsel %vm1043, %v1038, 0
        %v1394 = vsel %vm1043, %v1040, 0
        %v1397 = vsel %vm1043, %v1042, 0
        %1399 = vmatprep.subr.bf16.mxu0 0
        %1400 = vmatpush1.bf16.msra.mxu0 %v1336
        %1401 = vmatprep.subr.bf16.mxu0 0
        %1402 = vmatpush1.bf16.msra.mxu0 %v1337
        %1403 = vmatprep.subr.bf16.mxu0 0
        %1404 = vmatpush1.bf16.msra.mxu0 %v1338
        %1405 = vmatprep.subr.bf16.mxu0 0
        %1406 = vmatpush1.bf16.msra.mxu0 %v1339
        %1407 = vmatprep.subr.bf16.mxu0 0
        %1408 = vmatpush1.bf16.msra.mxu0 %v1340
        %1409 = vmatprep.subr.bf16.mxu0 0
        %1410 = vmatpush1.bf16.msra.mxu0 %v1341
        %1411 = vmatprep.subr.bf16.mxu0 0
        %1412 = vmatpush1.bf16.msra.mxu0 %v1342
        %1413 = vmatprep.subr.bf16.mxu0 0
        %1414 = vmatpush1.bf16.msra.mxu0 %v1343
        %1415 = vmatprep.subr.bf16.mxu0 0
        %1416 = vmatpush1.bf16.msra.mxu0 %v1344
        %1417 = vmatprep.subr.bf16.mxu0 0
        %1418 = vmatpush1.bf16.msra.mxu0 0
        %1419 = vmatprep.subr.bf16.mxu0 0
        %1420 = vmatpush1.bf16.msra.mxu0 0
        %1421 = vmatprep.subr.bf16.mxu0 0
        %1422 = vmatpush1.bf16.msra.mxu0 0
        %1423 = vmatprep.subr.bf16.mxu0 0
        %1424 = vmatpush1.bf16.msra.mxu0 0
        %1425 = vmatprep.subr.bf16.mxu0 0
        %1426 = vmatpush1.bf16.msra.mxu0 0
        %1427 = vmatprep.subr.bf16.mxu0 0
        %1428 = vmatpush1.bf16.msra.mxu0 0
        %1429 = vmatprep.subr.bf16.mxu0 0
        %1430 = vmatpush1.bf16.msra.mxu0 0
        %1431 = vmatprep.mubr.bf16.mxu0 %v1355
        %1432 = vmatmul.mubr.bf16.gmra.mrb[0].mxu0 %v1231
        %v1433 = vpop.f32.mrb[0].mxu0
        %v1434 = vadd.f32 %v1298, %v1433
        %v1435 = vpop.f32.mrb[0].mxu0
        %v1436 = vpop.f32.mrb[0].mxu0
        %v1437 = vadd.f32 %v1298, %v1436
        %v1438 = vpop.f32.mrb[0].mxu0
        %1439 = vmatprep.mubr.bf16.mxu0 %v1358
        %1440 = vmatmul.mubr.bf16.gmra.mrb[0].mxu0 %v1234
        %v1441 = vpop.f32.mrb[0].mxu0
        %v1442 = vadd.f32 %v1298, %v1441
        %v1443 = vpop.f32.mrb[0].mxu0
        %v1444 = vpop.f32.mrb[0].mxu0
        %v1445 = vadd.f32 %v1298, %v1444
        %v1446 = vpop.f32.mrb[0].mxu0
        %1447 = vmatprep.mubr.bf16.mxu0 %v1361
        %1448 = vmatmul.mubr.bf16.gmra.mrb[0].mxu0 %v1237
        %v1449 = vpop.f32.mrb[0].mxu0
        %v1450 = vadd.f32 %v1298, %v1449
        %v1451 = vpop.f32.mrb[0].mxu0
        %v1452 = vpop.f32.mrb[0].mxu0
        %v1453 = vadd.f32 %v1298, %v1452
        %v1454 = vpop.f32.mrb[0].mxu0
        %1455 = vmatprep.mubr.bf16.mxu0 %v1364
        %1456 = vmatmul.mubr.bf16.gmra.mrb[0].mxu0 %v1240
        %v1457 = vpop.f32.mrb[0].mxu0
        %v1458 = vadd.f32 %v1298, %v1457
        %v1459 = vpop.f32.mrb[0].mxu0
        %v1460 = vpop.f32.mrb[0].mxu0
        %v1461 = vadd.f32 %v1298, %v1460
        %v1462 = vpop.f32.mrb[0].mxu0
        %1463 = vmatprep.mubr.bf16.mxu0 %v1367
        %1464 = vmatmul.mubr.bf16.gmra.mrb[0].mxu0 %v1243
        %v1465 = vpop.f32.mrb[0].mxu0
        %v1466 = vadd.f32 %v1298, %v1465
        %v1467 = vpop.f32.mrb[0].mxu0
        %v1468 = vpop.f32.mrb[0].mxu0
        %v1469 = vadd.f32 %v1298, %v1468
        %v1470 = vpop.f32.mrb[0].mxu0
        %1471 = vmatprep.mubr.bf16.mxu0 %v1370
        %1472 = vmatmul.mubr.bf16.gmra.mrb[0].mxu0 %v1246
        %v1473 = vpop.f32.mrb[0].mxu0
        %v1474 = vadd.f32 %v1298, %v1473
        %v1475 = vpop.f32.mrb[0].mxu0
        %v1476 = vpop.f32.mrb[0].mxu0
        %v1477 = vadd.f32 %v1298, %v1476
        %v1478 = vpop.f32.mrb[0].mxu0
        %1479 = vmatprep.mubr.bf16.mxu0 %v1373
        %1480 = vmatmul.mubr.bf16.gmra.mrb[0].mxu0 %v1249
        %v1481 = vpop.f32.mrb[0].mxu0
        %v1482 = vadd.f32 %v1298, %v1481
        %v1483 = vpop.f32.mrb[0].mxu0
        %v1484 = vpop.f32.mrb[0].mxu0
        %v1485 = vadd.f32 %v1298, %v1484
        %v1486 = vpop.f32.mrb[0].mxu0
        %1487 = vmatprep.mubr.bf16.mxu0 %v1376
        %1488 = vmatmul.mubr.bf16.gmra.mrb[0].mxu0 %v1252
        %v1489 = vpop.f32.mrb[0].mxu0
        %v1490 = vadd.f32 %v1298, %v1489
        %v1491 = vpop.f32.mrb[0].mxu0
        %v1492 = vpop.f32.mrb[0].mxu0
        %v1493 = vadd.f32 %v1298, %v1492
        %v1494 = vpop.f32.mrb[0].mxu0
        %1495 = vmatprep.mubr.bf16.mxu0 %v1379
        %1496 = vmatmul.mubr.bf16.gmra.mrb[0].mxu0 %v1255
        %v1497 = vpop.f32.mrb[0].mxu0
        %v1498 = vadd.f32 %v1298, %v1497
        %v1499 = vpop.f32.mrb[0].mxu0
        %v1500 = vpop.f32.mrb[0].mxu0
        %v1501 = vadd.f32 %v1298, %v1500
        %v1502 = vpop.f32.mrb[0].mxu0
        %1503 = vmatprep.mubr.bf16.mxu0 %v1382
        %1504 = vmatmul.mubr.bf16.gmra.mrb[0].mxu0 %v1258
        %v1505 = vpop.f32.mrb[0].mxu0
        %v1506 = vadd.f32 %v1298, %v1505
        %v1507 = vpop.f32.mrb[0].mxu0
        %v1508 = vpop.f32.mrb[0].mxu0
        %v1509 = vadd.f32 %v1298, %v1508
        %v1510 = vpop.f32.mrb[0].mxu0
        %1511 = vmatprep.mubr.bf16.mxu0 %v1385
        %1512 = vmatmul.mubr.bf16.gmra.mrb[0].mxu0 %v1261
        %v1513 = vpop.f32.mrb[0].mxu0
        %v1514 = vadd.f32 %v1298, %v1513
        %v1515 = vpop.f32.mrb[0].mxu0
        %v1516 = vpop.f32.mrb[0].mxu0
        %v1517 = vadd.f32 %v1298, %v1516
        %v1518 = vpop.f32.mrb[0].mxu0
        %1519 = vmatprep.mubr.bf16.mxu0 %v1388
        %1520 = vmatmul.mubr.bf16.gmra.mrb[0].mxu0 %v1264
        %v1521 = vpop.f32.mrb[0].mxu0
        %v1522 = vadd.f32 %v1298, %v1521
        %v1523 = vpop.f32.mrb[0].mxu0
        %v1524 = vpop.f32.mrb[0].mxu0
        %v1525 = vadd.f32 %v1298, %v1524
        %v1526 = vpop.f32.mrb[0].mxu0
        %1527 = vmatprep.mubr.bf16.mxu0 %v1391
        %1528 = vmatmul.mubr.bf16.gmra.mrb[0].mxu0 %v1267
        %v1529 = vpop.f32.mrb[0].mxu0
        %v1530 = vadd.f32 %v1298, %v1529
        %v1531 = vpop.f32.mrb[0].mxu0
        %v1532 = vpop.f32.mrb[0].mxu0
        %v1533 = vadd.f32 %v1298, %v1532
        %v1534 = vpop.f32.mrb[0].mxu0
        %1535 = vmatprep.mubr.bf16.mxu0 %v1394
        %1536 = vmatmul.mubr.bf16.gmra.mrb[0].mxu0 %v1270
        %v1537 = vpop.f32.mrb[0].mxu0
        %v1538 = vadd.f32 %v1298, %v1537
        %v1539 = vpop.f32.mrb[0].mxu0
        %v1540 = vpop.f32.mrb[0].mxu0
        %v1541 = vadd.f32 %v1298, %v1540
        %v1542 = vpop.f32.mrb[0].mxu0
        %1543 = vmatprep.mubr.bf16.mxu0 %v1397
        %1544 = vmatmul.mubr.bf16.gmra.mrb[0].mxu0 %v1273
        %v1545 = vpop.f32.mrb[0].mxu0
        %v1546 = vadd.f32 %v1298, %v1545
        %v1547 = vpop.f32.mrb[0].mxu0
        %v1548 = vpop.f32.mrb[0].mxu0
        %v1549 = vadd.f32 %v1298, %v1548
        %v1550 = vpop.f32.mrb[0].mxu0
        %1551 = vdwg.mxu0
        %1552 = vst.msk [vmem:[%s342] sm:$0xff] %vm1074, %v1434
        %1553 = vst.msk [vmem:[%s342 + $0x8] sm:$0xff] %vm1074, %v1437
        %1554 = vst.msk [vmem:[%s342 + $0x10] sm:$0xff] %vm1074, %v1442
        %1555 = vst.msk [vmem:[%s342 + $0x18] sm:$0xff] %vm1074, %v1445
        %1556 = vst.msk [vmem:[%s342 + $0x20] sm:$0xff] %vm1074, %v1450
        %1557 = vst.msk [vmem:[%s342 + $0x28] sm:$0xff] %vm1074, %v1453
        %1558 = vst.msk [vmem:[%s342 + $0x30] sm:$0xff] %vm1074, %v1458
        %1559 = vst.msk [vmem:[%s342 + $0x38] sm:$0xff] %vm1074, %v1461
        %1560 = vst.msk [vmem:[%s342 + $0x40] sm:$0xff] %vm1074, %v1466
        %1561 = vst.msk [vmem:[%s342 + $0x48] sm:$0xff] %vm1074, %v1469
        %1562 = vst.msk [vmem:[%s342 + $0x50] sm:$0xff] %vm1074, %v1474
        %1563 = vst.msk [vmem:[%s342 + $0x58] sm:$0xff] %vm1074, %v1477
        %1564 = vst.msk [vmem:[%s342 + $0x60] sm:$0xff] %vm1074, %v1482
        %1565 = vst.msk [vmem:[%s342 + $0x68] sm:$0xff] %vm1074, %v1485
        %1566 = vst.msk [vmem:[%s342 + $0x70] sm:$0xff] %vm1074, %v1490
        %1567 = vst.msk [vmem:[%s342 + $0x78] sm:$0xff] %vm1074, %v1493
        %1568 = vst.msk [vmem:[%s342 + $0x80] sm:$0xff] %vm1074, %v1498
        %1569 = vst.msk [vmem:[%s342 + $0x88] sm:$0xff] %vm1074, %v1501
        %1570 = vst.msk [vmem:[%s342 + $0x90] sm:$0xff] %vm1074, %v1506
        %1571 = vst.msk [vmem:[%s342 + $0x98] sm:$0xff] %vm1074, %v1509
        %1572 = vst.msk [vmem:[%s342 + $0xa0] sm:$0xff] %vm1074, %v1514
        %1573 = vst.msk [vmem:[%s342 + $0xa8] sm:$0xff] %vm1074, %v1517
        %1574 = vst.msk [vmem:[%s342 + $0xb0] sm:$0xff] %vm1074, %v1522
        %1575 = vst.msk [vmem:[%s342 + $0xb8] sm:$0xff] %vm1074, %v1525
        %1576 = vst.msk [vmem:[%s342 + $0xc0] sm:$0xff] %vm1074, %v1530
        %1577 = vst.msk [vmem:[%s342 + $0xc8] sm:$0xff] %vm1074, %v1533
        %1578 = vst.msk [vmem:[%s342 + $0xd0] sm:$0xff] %vm1074, %v1538
        %1579 = vst.msk [vmem:[%s342 + $0xd8] sm:$0xff] %vm1074, %v1541
        %1580 = vst.msk [vmem:[%s342 + $0xe0] sm:$0xff] %vm1074, %v1546
        %1581 = vst.msk [vmem:[%s342 + $0xe8] sm:$0xff] %vm1074, %v1549
        %v1582 = vld [vmem:[%s336] sm:$0xff]
        %v1583 = vld [vmem:[%s336 + $0x8] sm:$0xff]
        %v1584 = vld [vmem:[%s336 + $0x10] sm:$0xff]
        %v1585 = vld [vmem:[%s336 + $0x18] sm:$0xff]
        %v1586 = vld [vmem:[%s336 + $0x20] sm:$0xff]
        %v1587 = vld [vmem:[%s336 + $0x28] sm:$0xff]
        %v1588 = vld [vmem:[%s336 + $0x30] sm:$0xff]
        %v1589 = vld [vmem:[%s336 + $0x38] sm:$0xff]
        %v1590 = vld [vmem:[%s336 + $0x40] sm:$0xff]
        %v1591 = vld [vmem:[%s336 + $0x48] sm:$0xff]
        %v1592 = vld [vmem:[%s336 + $0x50] sm:$0xff]
        %v1593 = vld [vmem:[%s336 + $0x58] sm:$0xff]
        %v1594 = vld [vmem:[%s336 + $0x60] sm:$0xff]
        %v1595 = vld [vmem:[%s336 + $0x68] sm:$0xff]
        %v1596 = vld [vmem:[%s336 + $0x70] sm:$0xff]
        %v1597 = vld [vmem:[%s336 + $0x78] sm:$0xff]
        %v1598 = vld [vmem:[%s336 + $0x80] sm:$0xff]
        %v1599 = vld [vmem:[%s336 + $0x88] sm:$0xff]
        %v1600 = vld [vmem:[%s336 + $0x90] sm:$0xff]
        %v1601 = vld [vmem:[%s336 + $0x98] sm:$0xff]
        %v1602 = vld [vmem:[%s336 + $0xa0] sm:$0xff]
        %v1603 = vld [vmem:[%s336 + $0xa8] sm:$0xff]
        %v1604 = vld [vmem:[%s336 + $0xb0] sm:$0xff]
        %v1605 = vld [vmem:[%s336 + $0xb8] sm:$0xff]
        %v1606 = vld [vmem:[%s336 + $0xc0] sm:$0xff]
        %v1607 = vld [vmem:[%s336 + $0xc8] sm:$0xff]
        %v1608 = vld [vmem:[%s336 + $0xd0] sm:$0xff]
        %v1609 = vld [vmem:[%s336 + $0xd8] sm:$0xff]
        %v1610 = vld [vmem:[%s336 + $0xe0] sm:$0xff]
        %v1611 = vld [vmem:[%s336 + $0xe8] sm:$0xff]
        %1613 = vset.pattern.permute.xlu0 0
        %1614 = vperm.xlu0 %1613, %v1582
        %v1615 = vpop.permute.xlu0 %1614
        %1618 = vset.pattern.permute.xlu0 0
        %1619 = vperm.xlu0 %1618, %v1583
        %v1620 = vpop.permute.xlu0 %1619
        %1623 = vset.pattern.permute.xlu0 0
        %1624 = vperm.xlu0 %1623, %v1584
        %v1625 = vpop.permute.xlu0 %1624
        %1628 = vset.pattern.permute.xlu0 0
        %1629 = vperm.xlu0 %1628, %v1585
        %v1630 = vpop.permute.xlu0 %1629
        %1633 = vset.pattern.permute.xlu0 0
        %1634 = vperm.xlu0 %1633, %v1586
        %v1635 = vpop.permute.xlu0 %1634
        %1638 = vset.pattern.permute.xlu0 0
        %1639 = vperm.xlu0 %1638, %v1587
        %v1640 = vpop.permute.xlu0 %1639
        %1643 = vset.pattern.permute.xlu0 0
        %1644 = vperm.xlu0 %1643, %v1588
        %v1645 = vpop.permute.xlu0 %1644
        %1648 = vset.pattern.permute.xlu0 0
        %1649 = vperm.xlu0 %1648, %v1589
        %v1650 = vpop.permute.xlu0 %1649
        %1653 = vset.pattern.permute.xlu0 0
        %1654 = vperm.xlu0 %1653, %v1590
        %v1655 = vpop.permute.xlu0 %1654
        %1658 = vset.pattern.permute.xlu0 0
        %1659 = vperm.xlu0 %1658, %v1591
        %v1660 = vpop.permute.xlu0 %1659
        %1663 = vset.pattern.permute.xlu0 0
        %1664 = vperm.xlu0 %1663, %v1592
        %v1665 = vpop.permute.xlu0 %1664
        %1668 = vset.pattern.permute.xlu0 0
        %1669 = vperm.xlu0 %1668, %v1593
        %v1670 = vpop.permute.xlu0 %1669
        %1673 = vset.pattern.permute.xlu0 0
        %1674 = vperm.xlu0 %1673, %v1594
        %v1675 = vpop.permute.xlu0 %1674
        %1678 = vset.pattern.permute.xlu0 0
        %1679 = vperm.xlu0 %1678, %v1595
        %v1680 = vpop.permute.xlu0 %1679
        %1683 = vset.pattern.permute.xlu0 0
        %1684 = vperm.xlu0 %1683, %v1596
        %v1685 = vpop.permute.xlu0 %1684
        %1688 = vset.pattern.permute.xlu0 0
        %1689 = vperm.xlu0 %1688, %v1597
        %v1690 = vpop.permute.xlu0 %1689
        %1693 = vset.pattern.permute.xlu0 0
        %1694 = vperm.xlu0 %1693, %v1598
        %v1695 = vpop.permute.xlu0 %1694
        %1698 = vset.pattern.permute.xlu0 0
        %1699 = vperm.xlu0 %1698, %v1599
        %v1700 = vpop.permute.xlu0 %1699
        %1703 = vset.pattern.permute.xlu0 0
        %1704 = vperm.xlu0 %1703, %v1600
        %v1705 = vpop.permute.xlu0 %1704
        %1708 = vset.pattern.permute.xlu0 0
        %1709 = vperm.xlu0 %1708, %v1601
        %v1710 = vpop.permute.xlu0 %1709
        %1713 = vset.pattern.permute.xlu0 0
        %1714 = vperm.xlu0 %1713, %v1602
        %v1715 = vpop.permute.xlu0 %1714
        %1718 = vset.pattern.permute.xlu0 0
        %1719 = vperm.xlu0 %1718, %v1603
        %v1720 = vpop.permute.xlu0 %1719
        %1723 = vset.pattern.permute.xlu0 0
        %1724 = vperm.xlu0 %1723, %v1604
        %v1725 = vpop.permute.xlu0 %1724
        %1728 = vset.pattern.permute.xlu0 0
        %1729 = vperm.xlu0 %1728, %v1605
        %v1730 = vpop.permute.xlu0 %1729
        %1733 = vset.pattern.permute.xlu0 0
        %1734 = vperm.xlu0 %1733, %v1606
        %v1735 = vpop.permute.xlu0 %1734
        %1738 = vset.pattern.permute.xlu0 0
        %1739 = vperm.xlu0 %1738, %v1607
        %v1740 = vpop.permute.xlu0 %1739
        %1743 = vset.pattern.permute.xlu0 0
        %1744 = vperm.xlu0 %1743, %v1608
        %v1745 = vpop.permute.xlu0 %1744
        %1748 = vset.pattern.permute.xlu0 0
        %1749 = vperm.xlu0 %1748, %v1609
        %v1750 = vpop.permute.xlu0 %1749
        %1753 = vset.pattern.permute.xlu0 0
        %1754 = vperm.xlu0 %1753, %v1610
        %v1755 = vpop.permute.xlu0 %1754
        %1758 = vset.pattern.permute.xlu0 0
        %1759 = vperm.xlu0 %1758, %v1611
        %v1760 = vpop.permute.xlu0 %1759
        %v1762 = vmul.f32 %v1434, %v1615
        %v1763 = vmul.f32 %v1437, %v1620
        %v1764 = vmul.f32 %v1442, %v1625
        %v1765 = vmul.f32 %v1445, %v1630
        %v1766 = vmul.f32 %v1450, %v1635
        %v1767 = vmul.f32 %v1453, %v1640
        %v1768 = vmul.f32 %v1458, %v1645
        %v1769 = vmul.f32 %v1461, %v1650
        %v1770 = vmul.f32 %v1466, %v1655
        %v1771 = vmul.f32 %v1469, %v1660
        %v1772 = vmul.f32 %v1474, %v1665
        %v1773 = vmul.f32 %v1477, %v1670
        %v1774 = vmul.f32 %v1482, %v1675
        %v1775 = vmul.f32 %v1485, %v1680
        %v1776 = vmul.f32 %v1490, %v1685
        %v1777 = vmul.f32 %v1493, %v1690
        %v1778 = vmul.f32 %v1498, %v1695
        %v1779 = vmul.f32 %v1501, %v1700
        %v1780 = vmul.f32 %v1506, %v1705
        %v1781 = vmul.f32 %v1509, %v1710
        %v1782 = vmul.f32 %v1514, %v1715
        %v1783 = vmul.f32 %v1517, %v1720
        %v1784 = vmul.f32 %v1522, %v1725
        %v1785 = vmul.f32 %v1525, %v1730
        %v1786 = vmul.f32 %v1530, %v1735
        %v1787 = vmul.f32 %v1533, %v1740
        %v1788 = vmul.f32 %v1538, %v1745
        %v1789 = vmul.f32 %v1541, %v1750
        %v1790 = vmul.f32 %v1546, %v1755
        %v1791 = vmul.f32 %v1549, %v1760
        %v1792 = vsel %vm1074, %v1762, 0.0
        %v1793 = vsel %vm1074, %v1763, 0.0
        %v1794 = vadd.f32 %v1792, %v1793
        %v1795 = vsel %vm1074, %v1764, 0.0
        %v1796 = vadd.f32 %v1794, %v1795
        %v1797 = vsel %vm1074, %v1765, 0.0
        %v1798 = vadd.f32 %v1796, %v1797
        %v1799 = vsel %vm1074, %v1766, 0.0
        %v1800 = vadd.f32 %v1798, %v1799
        %v1801 = vsel %vm1074, %v1767, 0.0
        %v1802 = vadd.f32 %v1800, %v1801
        %v1803 = vsel %vm1074, %v1768, 0.0
        %v1804 = vadd.f32 %v1802, %v1803
        %v1805 = vsel %vm1074, %v1769, 0.0
        %v1806 = vadd.f32 %v1804, %v1805
        %v1807 = vsel %vm1074, %v1770, 0.0
        %v1808 = vadd.f32 %v1806, %v1807
        %v1809 = vsel %vm1074, %v1771, 0.0
        %v1810 = vadd.f32 %v1808, %v1809
        %v1811 = vsel %vm1074, %v1772, 0.0
        %v1812 = vadd.f32 %v1810, %v1811
        %v1813 = vsel %vm1074, %v1773, 0.0
        %v1814 = vadd.f32 %v1812, %v1813
        %v1815 = vsel %vm1074, %v1774, 0.0
        %v1816 = vadd.f32 %v1814, %v1815
        %v1817 = vsel %vm1074, %v1775, 0.0
        %v1818 = vadd.f32 %v1816, %v1817
        %v1819 = vsel %vm1074, %v1776, 0.0
        %v1820 = vadd.f32 %v1818, %v1819
        %v1821 = vsel %vm1074, %v1777, 0.0
        %v1822 = vadd.f32 %v1820, %v1821
        %v1823 = vsel %vm1074, %v1778, 0.0
        %v1824 = vadd.f32 %v1822, %v1823
        %v1825 = vsel %vm1074, %v1779, 0.0
        %v1826 = vadd.f32 %v1824, %v1825
        %v1827 = vsel %vm1074, %v1780, 0.0
        %v1828 = vadd.f32 %v1826, %v1827
        %v1829 = vsel %vm1074, %v1781, 0.0
        %v1830 = vadd.f32 %v1828, %v1829
        %v1831 = vsel %vm1074, %v1782, 0.0
        %v1832 = vadd.f32 %v1830, %v1831
        %v1833 = vsel %vm1074, %v1783, 0.0
        %v1834 = vadd.f32 %v1832, %v1833
        %v1835 = vsel %vm1074, %v1784, 0.0
        %v1836 = vadd.f32 %v1834, %v1835
        %v1837 = vsel %vm1074, %v1785, 0.0
        %v1838 = vadd.f32 %v1836, %v1837
        %v1839 = vsel %vm1074, %v1786, 0.0
        %v1840 = vadd.f32 %v1838, %v1839
        %v1841 = vsel %vm1074, %v1787, 0.0
        %v1842 = vadd.f32 %v1840, %v1841
        %v1843 = vsel %vm1074, %v1788, 0.0
        %v1844 = vadd.f32 %v1842, %v1843
        %v1845 = vsel %vm1074, %v1789, 0.0
        %v1846 = vadd.f32 %v1844, %v1845
        %v1847 = vsel %vm1074, %v1790, 0.0
        %v1848 = vadd.f32 %v1846, %v1847
        %v1849 = vsel %vm1074, %v1791, 0.0
        %v1850 = vadd.f32 %v1848, %v1849
        %v1851 = vrot.slane %v1850, 4
        %v1852 = vadd.f32 %v1850, %v1851
        %v1853 = vrot.slane %v1852, 2
        %v1854 = vadd.f32 %v1852, %v1853
        %v1855 = vrot.slane %v1854, 1
        %v1856 = vadd.f32 %v1854, %v1855
        %v1857 = vmul.f32 %v1762, %v1434
        %v1858 = vmul.f32 %v1763, %v1437
        %v1859 = vmul.f32 %v1764, %v1442
        %v1860 = vmul.f32 %v1765, %v1445
        %v1861 = vmul.f32 %v1766, %v1450
        %v1862 = vmul.f32 %v1767, %v1453
        %v1863 = vmul.f32 %v1768, %v1458
        %v1864 = vmul.f32 %v1769, %v1461
        %v1865 = vmul.f32 %v1770, %v1466
        %v1866 = vmul.f32 %v1771, %v1469
        %v1867 = vmul.f32 %v1772, %v1474
        %v1868 = vmul.f32 %v1773, %v1477
        %v1869 = vmul.f32 %v1774, %v1482
        %v1870 = vmul.f32 %v1775, %v1485
        %v1871 = vmul.f32 %v1776, %v1490
        %v1872 = vmul.f32 %v1777, %v1493
        %v1873 = vmul.f32 %v1778, %v1498
        %v1874 = vmul.f32 %v1779, %v1501
        %v1875 = vmul.f32 %v1780, %v1506
        %v1876 = vmul.f32 %v1781, %v1509
        %v1877 = vmul.f32 %v1782, %v1514
        %v1878 = vmul.f32 %v1783, %v1517
        %v1879 = vmul.f32 %v1784, %v1522
        %v1880 = vmul.f32 %v1785, %v1525
        %v1881 = vmul.f32 %v1786, %v1530
        %v1882 = vmul.f32 %v1787, %v1533
        %v1883 = vmul.f32 %v1788, %v1538
        %v1884 = vmul.f32 %v1789, %v1541
        %v1885 = vmul.f32 %v1790, %v1546
        %v1886 = vmul.f32 %v1791, %v1549
        %v1887 = vsel %vm1074, %v1857, 0.0
        %v1888 = vsel %vm1074, %v1858, 0.0
        %v1889 = vadd.f32 %v1887, %v1888
        %v1890 = vsel %vm1074, %v1859, 0.0
        %v1891 = vadd.f32 %v1889, %v1890
        %v1892 = vsel %vm1074, %v1860, 0.0
        %v1893 = vadd.f32 %v1891, %v1892
        %v1894 = vsel %vm1074, %v1861, 0.0
        %v1895 = vadd.f32 %v1893, %v1894
        %v1896 = vsel %vm1074, %v1862, 0.0
        %v1897 = vadd.f32 %v1895, %v1896
        %v1898 = vsel %vm1074, %v1863, 0.0
        %v1899 = vadd.f32 %v1897, %v1898
        %v1900 = vsel %vm1074, %v1864, 0.0
        %v1901 = vadd.f32 %v1899, %v1900
        %v1902 = vsel %vm1074, %v1865, 0.0
        %v1903 = vadd.f32 %v1901, %v1902
        %v1904 = vsel %vm1074, %v1866, 0.0
        %v1905 = vadd.f32 %v1903, %v1904
        %v1906 = vsel %vm1074, %v1867, 0.0
        %v1907 = vadd.f32 %v1905, %v1906
        %v1908 = vsel %vm1074, %v1868, 0.0
        %v1909 = vadd.f32 %v1907, %v1908
        %v1910 = vsel %vm1074, %v1869, 0.0
        %v1911 = vadd.f32 %v1909, %v1910
        %v1912 = vsel %vm1074, %v1870, 0.0
        %v1913 = vadd.f32 %v1911, %v1912
        %v1914 = vsel %vm1074, %v1871, 0.0
        %v1915 = vadd.f32 %v1913, %v1914
        %v1916 = vsel %vm1074, %v1872, 0.0
        %v1917 = vadd.f32 %v1915, %v1916
        %v1918 = vsel %vm1074, %v1873, 0.0
        %v1919 = vadd.f32 %v1917, %v1918
        %v1920 = vsel %vm1074, %v1874, 0.0
        %v1921 = vadd.f32 %v1919, %v1920
        %v1922 = vsel %vm1074, %v1875, 0.0
        %v1923 = vadd.f32 %v1921, %v1922
        %v1924 = vsel %vm1074, %v1876, 0.0
        %v1925 = vadd.f32 %v1923, %v1924
        %v1926 = vsel %vm1074, %v1877, 0.0
        %v1927 = vadd.f32 %v1925, %v1926
        %v1928 = vsel %vm1074, %v1878, 0.0
        %v1929 = vadd.f32 %v1927, %v1928
        %v1930 = vsel %vm1074, %v1879, 0.0
        %v1931 = vadd.f32 %v1929, %v1930
        %v1932 = vsel %vm1074, %v1880, 0.0
        %v1933 = vadd.f32 %v1931, %v1932
        %v1934 = vsel %vm1074, %v1881, 0.0
        %v1935 = vadd.f32 %v1933, %v1934
        %v1936 = vsel %vm1074, %v1882, 0.0
        %v1937 = vadd.f32 %v1935, %v1936
        %v1938 = vsel %vm1074, %v1883, 0.0
        %v1939 = vadd.f32 %v1937, %v1938
        %v1940 = vsel %vm1074, %v1884, 0.0
        %v1941 = vadd.f32 %v1939, %v1940
        %v1942 = vsel %vm1074, %v1885, 0.0
        %v1943 = vadd.f32 %v1941, %v1942
        %v1944 = vsel %vm1074, %v1886, 0.0
        %v1945 = vadd.f32 %v1943, %v1944
        %v1946 = vrot.slane %v1945, 4
        %v1947 = vadd.f32 %v1945, %v1946
        %v1948 = vrot.slane %v1947, 2
        %v1949 = vadd.f32 %v1947, %v1948
        %v1950 = vrot.slane %v1949, 1
        %v1951 = vadd.f32 %v1949, %v1950
        %1953 = vrot.lane.b32.xlu0 %v1951, 32
        %v1954 = vpop.permute.xlu0 %1953
        %v1956 = vsel %vm1074, %v1856, %v1954
        %vm1957 = vcmask 1040384
        %v1958 = vsel %vm1957, %v1956, 0.0
        %1959 = vst.msk [vmem:[%s307] sm:$0xff] %vm1136, %v1958
        %s1960 = smul.u32 30, %s21
        %p1961 = scmp.lt.s32.totalorder %s1960, 89
        %s1962 = scalar_select %p1961, %s1960, 89
        %s1963 = smul.addr %s1962, 8
        %s1964 = scalar_lea.vmem %s5, %s1963
        %s1965 = sand.u32 %s179, 1
        %s1966 = scalar_lea.sflag [#allocation3], %s1965
        %s1967 = sand.u32 %s179, 1
        %s1968 = smul.addr %s1967, 8
        %s1969 = scalar_lea.vmem [#allocation2], %s1968
        // Predicated region
        $region41: #{tpu_custom_call.1} parent=39 // pred_check
          %p1970 = pneg %p163
        $region42: #{tpu_custom_call.1} parent=39 // pred_check_branch
          %1972 = sbr.rel (%p1970) target = $region44
        $region43: #{tpu_custom_call.1} parent=39 // pred_region
          %s1973 = smul.u32 30, %s21
        $region44: #{tpu_custom_call.1} parent=39 // pred_fallthru
          _
        // Predicated region
        $region45: #{tpu_custom_call.1} parent=39 // pred_check
          %p1974 = pneg %p189
        $region46: #{tpu_custom_call.1} parent=39 // pred_check_branch
          %1976 = sbr.rel (%p1974) target = $region48
        $region47: #{tpu_custom_call.1} parent=39 // pred_region
          %s1978 = ssub.s32 128, 128
          %1979 = vsyncadd %s1966, %s1978
          %s1980 = smul.addr %s21, 128
          %s1981 = scalar_lea.hbm %s6, %s1980
          %s1983 = sshll.u32 %s1969, 4
          %s1984 = int_to_ptr.vmem [resolvable:$true] %s1983
          %1986 = dma.vmem_to_hbm [thread:$0]  %s1984, 128, %s1981, %s1966
        $region48: #{tpu_custom_call.1} parent=39 // pred_fallthru
          _
      $region40: #{tpu_custom_call.1} parent=5 // pred_fallthru
        _
      %p1987 = scmp.le.s32.totalorder 2, %s16
      // Predicated region
      $region49: #{tpu_custom_call.1} parent=5 // pred_check
        %p1988 = pneg %p1987
      $region50: #{tpu_custom_call.1} parent=5 // pred_check_branch
        %1990 = sbr.rel (%p1988) target = $region52
      $region51: #{tpu_custom_call.1} parent=5 // pred_region
        %s1991 = ssub.s32 %s16, 2
        // Predicated region
        $region53: #{tpu_custom_call.1} parent=51 // pred_check
          %p1992 = pneg %p169
        $region54: #{tpu_custom_call.1} parent=51 // pred_check_branch
          %1994 = sbr.rel (%p1992) target = $region56
        $region55: #{tpu_custom_call.1} parent=51 // pred_region
          %s1995 = smul.u32 30, %s22
          %p1996 = scmp.lt.s32.totalorder %s1995, 89
          %s1997 = scalar_select %p1996, %s1995, 89
          %s1998 = smul.addr %s1997, 8
          %s1999 = scalar_lea.vmem %s5, %s1998
        $region56: #{tpu_custom_call.1} parent=51 // pred_fallthru
          _
        // Predicated region
        $region57: #{tpu_custom_call.1} parent=51 // pred_check
          %p2000 = pneg %p195
        $region58: #{tpu_custom_call.1} parent=51 // pred_check_branch
          %2002 = sbr.rel (%p2000) target = $region60
        $region59: #{tpu_custom_call.1} parent=51 // pred_region
          %s2003 = sand.u32 %s180, 1
          %s2004 = scalar_lea.sflag [#allocation3], %s2003
          %s2005 = sand.u32 %s180, 1
          %s2006 = smul.addr %s2005, 8
          %s2007 = scalar_lea.vmem [#allocation2], %s2006
          %2008 = dma.done %s2004, 128
        $region60: #{tpu_custom_call.1} parent=51 // pred_fallthru
          _
      $region52: #{tpu_custom_call.1} parent=5 // pred_fallthru
        _
    $region6: #{tpu_custom_call.1} parent=1 // loop_footer
      %s20 = sadd.s32 1, %s16
    $region7: #{tpu_custom_call.1} parent=1 // loop_footer_branch
      %15 = sbr.rel target = $region3
    $region8: #{tpu_custom_call.1} parent=1 // loop_exit
      _
    %2009 = vsyncpa [#allocation3], 1
    %s2010 = scalar_lea.sflag [#allocation3], 1
    %2011 = vsyncpa %s2010, 1

</llo_original>
